<compile_context>
chip_gen: v7x
topology: tpu7x:2x2x1
jax: 0.10.0
libtpu: 0.0.40
codegen_flags: <defaults>
</compile_context>

<pallas_src>
import numpy as np
import jax
import jax.numpy as jnp
from jax import lax
from jax.experimental import pallas as pl
from jax.experimental.pallas import tpu as pltpu


def _round_up(x, m):
    return ((x + m - 1) // m) * m


# ----------------------------------------------------------------------------------
# Fused kernel: pair-decomposed prototype scoring (max over K) + ATLoss epilogue.
# One grid step handles one batch item (all Q queries of the episode at once).
# ----------------------------------------------------------------------------------
def _make_fused_kernel(E, C, K, Q, E_pad, n_off):
    big = 1e30
    inv_n = 1.0 / float(max(n_off, 1))   # guard E == 1 (no off-diagonal pairs)

    def kernel(embs_ref, proto_ref, labels_ref, scores_ref, loss_ref):
        # embs_ref   : [Q*E_pad, H_pad]     f32  entity embeddings (zero-padded rows/lanes)
        # proto_ref  : [2K, C, H_pad]       f32  slabs 0..K-1 = head half, K..2K-1 = tail half
        # labels_ref : [Q*E_pad, E_pad, C]  f32  per-pair labels (row = q*E_pad + h, sub = t)
        # scores_ref : [Q*E_pad, E_pad, C]  f32
        # loss_ref   : [1, 128]             f32  episode-summed ATLoss (per-query means summed)
        embs = embs_ref[...]                                         # [QE, H_pad]
        nt = (((1,), (1,)), ((), ()))                                # contract H with H

        # --- pair-decomposed scoring: <[h;t], proto[c,k]> = h.ph[c,k] + t.pt[c,k] ---
        s = None
        for k in range(K):
            hk = lax.dot_general(embs, proto_ref[k], nt,
                                 preferred_element_type=jnp.float32)      # [QE, C]
            tk = lax.dot_general(embs, proto_ref[K + k], nt,
                                 preferred_element_type=jnp.float32)      # [QE, C]
            hk = hk.reshape(Q, E_pad, C)
            tk = tk.reshape(Q, E_pad, C)
            sk = hk[:, :, None, :] + tk[:, None, :, :]               # [Q, E_pad, E_pad, C]
            s = sk if s is None else jnp.maximum(s, sk)              # max over K prototypes

        scores_ref[...] = s.reshape(Q * E_pad, E_pad, C)

        # --- fused ATLoss (class 0 = threshold class), all f32 ---
        labels = labels_ref[...].reshape(Q, E_pad, E_pad, C)
        col = lax.broadcasted_iota(jnp.int32, (Q, E_pad, E_pad, C), 3)
        th_label = (col == 0).astype(jnp.float32)
        labels = jnp.where(col == 0, 0.0, labels)

        p_mask = labels + th_label
        n_mask = 1.0 - labels
        logit1 = s - (1.0 - p_mask) * big
        logit2 = s - (1.0 - n_mask) * big

        def log_softmax(x):
            m = jnp.max(x, axis=-1, keepdims=True)
            z = x - m
            return z - jnp.log(jnp.sum(jnp.exp(z), axis=-1, keepdims=True))

        loss1 = -jnp.sum(log_softmax(logit1) * labels, axis=-1)      # [Q, E_pad, E_pad]
        loss2 = -jnp.sum(log_softmax(logit2) * th_label, axis=-1)    # [Q, E_pad, E_pad]

        # valid-pair mask built in-kernel (h < E, t < E, h != t) — no DMA'd mask input.
        h_idx = lax.broadcasted_iota(jnp.int32, (Q, E_pad, E_pad), 1)
        t_idx = lax.broadcasted_iota(jnp.int32, (Q, E_pad, E_pad), 2)
        valid = ((h_idx < E) & (t_idx < E) & (h_idx != t_idx)).astype(jnp.float32)

        per_pair = (loss1 + loss2) * valid                           # [Q, E_pad, E_pad]
        tot = jnp.sum(per_pair, axis=2, keepdims=True)               # [Q, E_pad, 1]
        tot = jnp.sum(tot, axis=1, keepdims=True)                    # [Q, 1, 1]
        tot = jnp.sum(tot, axis=0, keepdims=True)                    # [1, 1, 1]
        loss_ref[...] = jnp.broadcast_to(tot[0] * inv_n, (1, 128))

    return kernel


def fused_scores_and_loss(embs, proto_all, labels, *, E, C, K, Q, E_pad, n_off):
    """embs: [B, Q*E_pad, H_pad] f32; proto_all: [B, 2K, C, H_pad] f32;
       labels: [B, Q*E_pad, E_pad, C] f32
       -> scores [B, Q*E_pad, E_pad, C] f32, per-episode loss row [B, 1, 128] f32."""
    B, QE, H_pad = embs.shape
    kernel = _make_fused_kernel(E, C, K, Q, E_pad, n_off)

    return pl.pallas_call(
        kernel,
        out_shape=(
            jax.ShapeDtypeStruct((B, QE, E_pad, C), jnp.float32),
            jax.ShapeDtypeStruct((B, 1, 128), jnp.float32),
        ),
        grid_spec=pltpu.PrefetchScalarGridSpec(
            num_scalar_prefetch=0,
            grid=(B,),
            in_specs=[
                pl.BlockSpec((pl.Squeezed(), QE, H_pad), lambda b: (b, 0, 0)),
                pl.BlockSpec((pl.Squeezed(), 2 * K, C, H_pad), lambda b: (b, 0, 0, 0)),
                pl.BlockSpec((pl.Squeezed(), QE, E_pad, C), lambda b: (b, 0, 0, 0)),
            ],
            out_specs=[
                pl.BlockSpec((pl.Squeezed(), QE, E_pad, C), lambda b: (b, 0, 0, 0)),
                pl.BlockSpec((pl.Squeezed(), 1, 128), lambda b: (b, 0, 0)),
            ],
        ),
        compiler_params=pltpu.CompilerParams(
            dimension_semantics=("parallel",)),
    )(embs, proto_all, labels)


# ----------------------------------------------------------------------------------
# Plain-JAX glue (vectorized, jitted) reproducing the surrounding PyTorch logic.
# ----------------------------------------------------------------------------------
def at_get_label(logits):
    """ATLoss.get_label with num_labels=1, class 0 = threshold class (batched)."""
    th = logits[..., 0:1]
    mask = logits > th
    top_v = jnp.max(logits, axis=-1, keepdims=True)        # topk(..., 1)
    mask = (logits >= top_v) & mask
    out = mask.astype(jnp.float32)
    out = out.at[..., 0].set((jnp.sum(out, axis=-1) == 0).astype(jnp.float32))
    return out


def build_pool_matrix(entity_mentions, L, markers=True):
    """Pooling matrix W [E, L]: embs = W @ seq reproduces the mention/entity means."""
    E = len(entity_mentions)
    W = np.zeros((E, L), np.float32)
    for e, mentions in enumerate(entity_mentions):
        nm = len(mentions)
        for (m0, m1) in mentions:
            if markers:
                W[e, m0] += 1.0 / nm
            else:
                span = max(m1 - m0, 1)
                W[e, m0:m1] += 1.0 / (nm * span)
    return W


def make_labels(E, C, nota_id, triples):
    lab = np.zeros((E, E, C), np.float32)
    lab[:, :, nota_id] = 1.0
    for k in range(E):
        lab[k, k, nota_id] = 0.0
    for (l_h, l_t, l_r) in triples:
        lab[l_h, l_t, nota_id] = 0.0
        lab[l_h, l_t, l_r] = 1.0
    return lab


def build_forward(E, C, K, H):
    E_pad = _round_up(max(E, 8), 8)
    H_pad = _round_up(H, 128)
    n_off = max(E * (E - 1), 1)

    @jax.jit
    def forward(sequence_output, prototypes, pool_w, labels_dense):
        # sequence_output: [B, Q, L, H] f32      (stand-in for encode() output)
        # prototypes:      [B, C, K, 2H] f32     (stand-in for set_exemplars() output)
        # pool_w:          [E, L] f32            mention pooling matrix
        # labels_dense:    [B, Q, E, E, C] f32
        B, Q, L, Hh = sequence_output.shape

        # entity embeddings per (b, q): [B, Q, E, H] -> padded [B, Q*E_pad, H_pad]
        embs = jnp.einsum('el,bqlh->bqeh', pool_w, sequence_output)
        embs = jnp.pad(embs, ((0, 0), (0, 0), (0, E_pad - E), (0, H_pad - Hh)))
        embs = embs.reshape(B, Q * E_pad, H_pad)

        # compact prototype pack: head / tail halves, [B, 2K, C, H_pad] (lane-dense in H)
        p_head = jnp.transpose(prototypes[..., :Hh], (0, 2, 1, 3))    # [B, K, C, H]
        p_tail = jnp.transpose(prototypes[..., Hh:], (0, 2, 1, 3))    # [B, K, C, H]
        proto_all = jnp.concatenate([p_head, p_tail], axis=1)         # [B, 2K, C, H]
        proto_all = jnp.pad(proto_all, ((0, 0), (0, 0), (0, 0), (0, H_pad - Hh)))

        # labels: [B, Q*E_pad, E_pad, C]
        lab = jnp.pad(labels_dense,
                      ((0, 0), (0, 0), (0, E_pad - E), (0, E_pad - E), (0, 0)))
        lab = lab.reshape(B, Q * E_pad, E_pad, C)

        scores_pad, loss_b = fused_scores_and_loss(
            embs, proto_all, lab, E=E, C=C, K=K, Q=Q, E_pad=E_pad, n_off=n_off)

        scores = scores_pad.reshape(B, Q, E_pad, E_pad, C)[:, :, :E, :E, :]
        preds = at_get_label(scores)
        # matches PyTorch: per-(b,q) means summed over (b,q), divided by batch size only
        loss = jnp.sum(loss_b[:, 0, 0]) / jnp.float32(B)
        return preds, scores, loss

    return forward


def extract_matches(preds_np, type_labels, nota_ids):
    """Host-side bookkeeping (pure Python in the original too)."""
    B, Q, E, _, C = preds_np.shape
    all_matches = []
    for b in range(B):
        matches = []
        for q in range(Q):
            m = []
            for ih in range(E):
                for it in range(E):
                    if ih == it:
                        continue
                    for rt in range(C):
                        if rt == nota_ids[b]:
                            continue
                        if preds_np[b, q, ih, it, rt] == 1.0:
                            m.append([ih, it, type_labels[b][rt]])
            matches.append(m)
        all_matches.append(matches)
    return all_matches


if __name__ == "__main__":
    # Small, deterministic synthetic episode.
    B, Q, L, H = 2, 1, 16, 32          # batch, queries/episode, seq-len, hidden
    E, C, K = 4, 3, 5                  # entities/query, relation types (NOTA=idx 0), protos/class
    D2 = 2 * H

    key = jax.random.PRNGKey(0)
    k_seq, k_proto, k_nota = jax.random.split(key, 3)

    # Parameters (deterministic init mirroring __init__ shapes, scaled to 2H=64):
    nota_embeddings = jax.random.uniform(k_nota, (20, D2), jnp.float32, -1.0, 1.0)

    # Stand-in for encode(): sequence output per (batch, query).
    sequence_output = jax.random.normal(k_seq, (B, Q, L, H), jnp.float32)

    # Stand-in for set_exemplars(): class prototypes; NOTA class uses nota_embeddings.
    rel_protos = jax.random.uniform(k_proto, (B, C - 1, K, D2), jnp.float32, -1.0, 1.0)
    nota_protos = jnp.broadcast_to(nota_embeddings[:K][None], (B, 1, K, D2))
    prototypes = jnp.concatenate([nota_protos, rel_protos], axis=1)   # [B, C, K, 2H]

    # Entity/mention positions (markers=True -> take mention-start token embedding).
    entity_mentions = [[(1, 3), (3, 5)], [(4, 6)], [(7, 9)], [(10, 12)]]

    type_labels = [["NOTA", "rel_A", "rel_B"], ["NOTA", "rel_A", "rel_B"]]
    nota_ids = [tl.index("NOTA") for tl in type_labels]
    query_triples = [[[(0, 1, 1), (2, 3, 2)]],    # batch 0, query 0
                     [[(1, 0, 2)]]]               # batch 1, query 0
    labels_dense = np.stack([
        np.stack([make_labels(E, C, nota_ids[b], query_triples[b][q]) for q in range(Q)], 0)
        for b in range(B)], 0)                    # [B, Q, E, E, C]

    pool_w = build_pool_matrix(entity_mentions, L, markers=True)

    forward = build_forward(E, C, K, H)
    preds, scores, loss = forward(sequence_output, prototypes,
                                  jnp.asarray(pool_w), jnp.asarray(labels_dense))
    loss = jax.block_until_ready(loss)

    preds_np = np.asarray(jax.device_get(preds))
    all_matches = extract_matches(preds_np, type_labels, nota_ids)

    assert np.isfinite(float(loss))
    print("KERNEL_OK")
</pallas_src>

<mosaic_0001>
module attributes {stable_mosaic.version = 11 : i64} {
  func.func @kernel(%arg0: i32, %arg1: memref<1x8x128xf32, #tpu.memory_space<vmem>>, %arg2: memref<1x10x3x128xf32, #tpu.memory_space<vmem>>, %arg3: memref<1x8x8x3xf32, #tpu.memory_space<vmem>>, %arg4: memref<1x8x8x3xf32, #tpu.memory_space<vmem>>, %arg5: memref<1x1x128xf32, #tpu.memory_space<vmem>>) attributes {dimension_semantics = [#tpu.dimension_semantics<parallel>], iteration_bounds = array<i64: 2>, scalar_prefetch = 0 : i64, scratch_operands = 0 : i64, tpu.core_type = #tpu.core_type<tc>, window_params = [{transform_indices = @transform_0, window_bounds = array<i64: 1, 8, 128>}, {transform_indices = @transform_1, window_bounds = array<i64: 1, 10, 3, 128>}, {transform_indices = @transform_2, window_bounds = array<i64: 1, 8, 8, 3>}, {transform_indices = @transform_3, window_bounds = array<i64: 1, 8, 8, 3>}, {transform_indices = @transform_4, window_bounds = array<i64: 1, 1, 128>}]} {
    %c0 = arith.constant 0 : index
    %c0_0 = arith.constant 0 : index
    %c0_1 = arith.constant 0 : index
    %0 = vector.load %arg1[%c0, %c0_0, %c0_1] : memref<1x8x128xf32, #tpu.memory_space<vmem>>, vector<1x8x128xf32>
    %1 = vector.shape_cast %0 : vector<1x8x128xf32> to vector<8x128xf32>
    %c0_2 = arith.constant 0 : index
    %c0_3 = arith.constant 0 : index
    %c0_4 = arith.constant 0 : index
    %c0_5 = arith.constant 0 : index
    %2 = vector.load %arg2[%c0_2, %c0_3, %c0_4, %c0_5] : memref<1x10x3x128xf32, #tpu.memory_space<vmem>>, vector<1x1x3x128xf32>
    %3 = vector.shape_cast %2 : vector<1x1x3x128xf32> to vector<3x128xf32>
    %cst = arith.constant dense<0.000000e+00> : vector<8x3xf32>
    %4 = tpu.matmul %1, %3, %cst {dimension_numbers = #tpu.dot_dimension_numbers<[1], [1], [0], [0], [0, 0, 1, 0], [], []>} : vector<8x128xf32>, vector<3x128xf32>, vector<8x3xf32> -> vector<8x3xf32>
    %c0_6 = arith.constant 0 : index
    %c5 = arith.constant 5 : index
    %c0_7 = arith.constant 0 : index
    %c0_8 = arith.constant 0 : index
    %5 = vector.load %arg2[%c0_6, %c5, %c0_7, %c0_8] : memref<1x10x3x128xf32, #tpu.memory_space<vmem>>, vector<1x1x3x128xf32>
    %6 = vector.shape_cast %5 : vector<1x1x3x128xf32> to vector<3x128xf32>
    %cst_9 = arith.constant dense<0.000000e+00> : vector<8x3xf32>
    %7 = tpu.matmul %1, %6, %cst_9 {dimension_numbers = #tpu.dot_dimension_numbers<[1], [1], [0], [0], [0, 0, 1, 0], [], []>} : vector<8x128xf32>, vector<3x128xf32>, vector<8x3xf32> -> vector<8x3xf32>
    %8 = vector.shape_cast %4 : vector<8x3xf32> to vector<1x8x3xf32>
    %9 = vector.shape_cast %7 : vector<8x3xf32> to vector<1x8x3xf32>
    %10 = vector.shape_cast %8 : vector<1x8x3xf32> to vector<1x8x1x3xf32>
    %11 = vector.shape_cast %9 : vector<1x8x3xf32> to vector<1x1x8x3xf32>
    %12 = vector.broadcast %10 : vector<1x8x1x3xf32> to vector<1x8x8x3xf32>
    %13 = vector.broadcast %11 : vector<1x1x8x3xf32> to vector<1x8x8x3xf32>
    %14 = arith.addf %12, %13 : vector<1x8x8x3xf32>
    %c0_10 = arith.constant 0 : index
    %c1 = arith.constant 1 : index
    %c0_11 = arith.constant 0 : index
    %c0_12 = arith.constant 0 : index
    %15 = vector.load %arg2[%c0_10, %c1, %c0_11, %c0_12] : memref<1x10x3x128xf32, #tpu.memory_space<vmem>>, vector<1x1x3x128xf32>
    %16 = vector.shape_cast %15 : vector<1x1x3x128xf32> to vector<3x128xf32>
    %cst_13 = arith.constant dense<0.000000e+00> : vector<8x3xf32>
    %17 = tpu.matmul %1, %16, %cst_13 {dimension_numbers = #tpu.dot_dimension_numbers<[1], [1], [0], [0], [0, 0, 1, 0], [], []>} : vector<8x128xf32>, vector<3x128xf32>, vector<8x3xf32> -> vector<8x3xf32>
    %c0_14 = arith.constant 0 : index
    %c6 = arith.constant 6 : index
    %c0_15 = arith.constant 0 : index
    %c0_16 = arith.constant 0 : index
    %18 = vector.load %arg2[%c0_14, %c6, %c0_15, %c0_16] : memref<1x10x3x128xf32, #tpu.memory_space<vmem>>, vector<1x1x3x128xf32>
    %19 = vector.shape_cast %18 : vector<1x1x3x128xf32> to vector<3x128xf32>
    %cst_17 = arith.constant dense<0.000000e+00> : vector<8x3xf32>
    %20 = tpu.matmul %1, %19, %cst_17 {dimension_numbers = #tpu.dot_dimension_numbers<[1], [1], [0], [0], [0, 0, 1, 0], [], []>} : vector<8x128xf32>, vector<3x128xf32>, vector<8x3xf32> -> vector<8x3xf32>
    %21 = vector.shape_cast %17 : vector<8x3xf32> to vector<1x8x3xf32>
    %22 = vector.shape_cast %20 : vector<8x3xf32> to vector<1x8x3xf32>
    %23 = vector.shape_cast %21 : vector<1x8x3xf32> to vector<1x8x1x3xf32>
    %24 = vector.shape_cast %22 : vector<1x8x3xf32> to vector<1x1x8x3xf32>
    %25 = vector.broadcast %23 : vector<1x8x1x3xf32> to vector<1x8x8x3xf32>
    %26 = vector.broadcast %24 : vector<1x1x8x3xf32> to vector<1x8x8x3xf32>
    %27 = arith.addf %25, %26 : vector<1x8x8x3xf32>
    %28 = arith.maximumf %14, %27 : vector<1x8x8x3xf32>
    %c0_18 = arith.constant 0 : index
    %c2 = arith.constant 2 : index
    %c0_19 = arith.constant 0 : index
    %c0_20 = arith.constant 0 : index
    %29 = vector.load %arg2[%c0_18, %c2, %c0_19, %c0_20] : memref<1x10x3x128xf32, #tpu.memory_space<vmem>>, vector<1x1x3x128xf32>
    %30 = vector.shape_cast %29 : vector<1x1x3x128xf32> to vector<3x128xf32>
    %cst_21 = arith.constant dense<0.000000e+00> : vector<8x3xf32>
    %31 = tpu.matmul %1, %30, %cst_21 {dimension_numbers = #tpu.dot_dimension_numbers<[1], [1], [0], [0], [0, 0, 1, 0], [], []>} : vector<8x128xf32>, vector<3x128xf32>, vector<8x3xf32> -> vector<8x3xf32>
    %c0_22 = arith.constant 0 : index
    %c7 = arith.constant 7 : index
    %c0_23 = arith.constant 0 : index
    %c0_24 = arith.constant 0 : index
    %32 = vector.load %arg2[%c0_22, %c7, %c0_23, %c0_24] : memref<1x10x3x128xf32, #tpu.memory_space<vmem>>, vector<1x1x3x128xf32>
    %33 = vector.shape_cast %32 : vector<1x1x3x128xf32> to vector<3x128xf32>
    %cst_25 = arith.constant dense<0.000000e+00> : vector<8x3xf32>
    %34 = tpu.matmul %1, %33, %cst_25 {dimension_numbers = #tpu.dot_dimension_numbers<[1], [1], [0], [0], [0, 0, 1, 0], [], []>} : vector<8x128xf32>, vector<3x128xf32>, vector<8x3xf32> -> vector<8x3xf32>
    %35 = vector.shape_cast %31 : vector<8x3xf32> to vector<1x8x3xf32>
    %36 = vector.shape_cast %34 : vector<8x3xf32> to vector<1x8x3xf32>
    %37 = vector.shape_cast %35 : vector<1x8x3xf32> to vector<1x8x1x3xf32>
    %38 = vector.shape_cast %36 : vector<1x8x3xf32> to vector<1x1x8x3xf32>
    %39 = vector.broadcast %37 : vector<1x8x1x3xf32> to vector<1x8x8x3xf32>
    %40 = vector.broadcast %38 : vector<1x1x8x3xf32> to vector<1x8x8x3xf32>
    %41 = arith.addf %39, %40 : vector<1x8x8x3xf32>
    %42 = arith.maximumf %28, %41 : vector<1x8x8x3xf32>
    %c0_26 = arith.constant 0 : index
    %c3 = arith.constant 3 : index
    %c0_27 = arith.constant 0 : index
    %c0_28 = arith.constant 0 : index
    %43 = vector.load %arg2[%c0_26, %c3, %c0_27, %c0_28] : memref<1x10x3x128xf32, #tpu.memory_space<vmem>>, vector<1x1x3x128xf32>
    %44 = vector.shape_cast %43 : vector<1x1x3x128xf32> to vector<3x128xf32>
    %cst_29 = arith.constant dense<0.000000e+00> : vector<8x3xf32>
    %45 = tpu.matmul %1, %44, %cst_29 {dimension_numbers = #tpu.dot_dimension_numbers<[1], [1], [0], [0], [0, 0, 1, 0], [], []>} : vector<8x128xf32>, vector<3x128xf32>, vector<8x3xf32> -> vector<8x3xf32>
    %c0_30 = arith.constant 0 : index
    %c8 = arith.constant 8 : index
    %c0_31 = arith.constant 0 : index
    %c0_32 = arith.constant 0 : index
    %46 = vector.load %arg2[%c0_30, %c8, %c0_31, %c0_32] : memref<1x10x3x128xf32, #tpu.memory_space<vmem>>, vector<1x1x3x128xf32>
    %47 = vector.shape_cast %46 : vector<1x1x3x128xf32> to vector<3x128xf32>
    %cst_33 = arith.constant dense<0.000000e+00> : vector<8x3xf32>
    %48 = tpu.matmul %1, %47, %cst_33 {dimension_numbers = #tpu.dot_dimension_numbers<[1], [1], [0], [0], [0, 0, 1, 0], [], []>} : vector<8x128xf32>, vector<3x128xf32>, vector<8x3xf32> -> vector<8x3xf32>
    %49 = vector.shape_cast %45 : vector<8x3xf32> to vector<1x8x3xf32>
    %50 = vector.shape_cast %48 : vector<8x3xf32> to vector<1x8x3xf32>
    %51 = vector.shape_cast %49 : vector<1x8x3xf32> to vector<1x8x1x3xf32>
    %52 = vector.shape_cast %50 : vector<1x8x3xf32> to vector<1x1x8x3xf32>
    %53 = vector.broadcast %51 : vector<1x8x1x3xf32> to vector<1x8x8x3xf32>
    %54 = vector.broadcast %52 : vector<1x1x8x3xf32> to vector<1x8x8x3xf32>
    %55 = arith.addf %53, %54 : vector<1x8x8x3xf32>
    %56 = arith.maximumf %42, %55 : vector<1x8x8x3xf32>
    %c0_34 = arith.constant 0 : index
    %c4 = arith.constant 4 : index
    %c0_35 = arith.constant 0 : index
    %c0_36 = arith.constant 0 : index
    %57 = vector.load %arg2[%c0_34, %c4, %c0_35, %c0_36] : memref<1x10x3x128xf32, #tpu.memory_space<vmem>>, vector<1x1x3x128xf32>
    %58 = vector.shape_cast %57 : vector<1x1x3x128xf32> to vector<3x128xf32>
    %cst_37 = arith.constant dense<0.000000e+00> : vector<8x3xf32>
    %59 = tpu.matmul %1, %58, %cst_37 {dimension_numbers = #tpu.dot_dimension_numbers<[1], [1], [0], [0], [0, 0, 1, 0], [], []>} : vector<8x128xf32>, vector<3x128xf32>, vector<8x3xf32> -> vector<8x3xf32>
    %c0_38 = arith.constant 0 : index
    %c9 = arith.constant 9 : index
    %c0_39 = arith.constant 0 : index
    %c0_40 = arith.constant 0 : index
    %60 = vector.load %arg2[%c0_38, %c9, %c0_39, %c0_40] : memref<1x10x3x128xf32, #tpu.memory_space<vmem>>, vector<1x1x3x128xf32>
    %61 = vector.shape_cast %60 : vector<1x1x3x128xf32> to vector<3x128xf32>
    %cst_41 = arith.constant dense<0.000000e+00> : vector<8x3xf32>
    %62 = tpu.matmul %1, %61, %cst_41 {dimension_numbers = #tpu.dot_dimension_numbers<[1], [1], [0], [0], [0, 0, 1, 0], [], []>} : vector<8x128xf32>, vector<3x128xf32>, vector<8x3xf32> -> vector<8x3xf32>
    %63 = vector.shape_cast %59 : vector<8x3xf32> to vector<1x8x3xf32>
    %64 = vector.shape_cast %62 : vector<8x3xf32> to vector<1x8x3xf32>
    %65 = vector.shape_cast %63 : vector<1x8x3xf32> to vector<1x8x1x3xf32>
    %66 = vector.shape_cast %64 : vector<1x8x3xf32> to vector<1x1x8x3xf32>
    %67 = vector.broadcast %65 : vector<1x8x1x3xf32> to vector<1x8x8x3xf32>
    %68 = vector.broadcast %66 : vector<1x1x8x3xf32> to vector<1x8x8x3xf32>
    %69 = arith.addf %67, %68 : vector<1x8x8x3xf32>
    %70 = arith.maximumf %56, %69 : vector<1x8x8x3xf32>
    %71 = vector.shape_cast %70 : vector<1x8x8x3xf32> to vector<8x8x3xf32>
    %c0_42 = arith.constant 0 : index
    %c0_43 = arith.constant 0 : index
    %c0_44 = arith.constant 0 : index
    %c0_45 = arith.constant 0 : index
    %72 = vector.load %arg4[%c0_42, %c0_43, %c0_44, %c0_45] : memref<1x8x8x3xf32, #tpu.memory_space<vmem>>, vector<1x8x8x3xf32>
    %73 = vector.shape_cast %72 : vector<1x8x8x3xf32> to vector<8x8x3xf32>
    %74 = vector.shape_cast %71 : vector<8x8x3xf32> to vector<1x8x8x3xf32>
    tpu.vector_store %arg4[%c0_42, %c0_43, %c0_44, %c0_45], %74 {strides = array<i32>} : memref<1x8x8x3xf32, #tpu.memory_space<vmem>>, vector<1x8x8x3xf32>,
    %c0_46 = arith.constant 0 : index
    %c0_47 = arith.constant 0 : index
    %c0_48 = arith.constant 0 : index
    %c0_49 = arith.constant 0 : index
    %75 = vector.load %arg3[%c0_46, %c0_47, %c0_48, %c0_49] : memref<1x8x8x3xf32, #tpu.memory_space<vmem>>, vector<1x8x8x3xf32>
    %76 = vector.shape_cast %75 : vector<1x8x8x3xf32> to vector<8x8x3xf32>
    %77 = vector.shape_cast %76 : vector<8x8x3xf32> to vector<1x8x8x3xf32>
    %78 = tpu.iota {dimensions = array<i32: 3>} : vector<1x8x8x3xi32>
    %c0_i32 = arith.constant 0 : i32
    %79 = vector.broadcast %c0_i32 : i32 to vector<1x8x8x3xi32>
    %80 = arith.cmpi eq, %78, %79 : vector<1x8x8x3xi32>
    %81 = arith.extui %80 : vector<1x8x8x3xi1> to vector<1x8x8x3xi32>
    %82 = arith.sitofp %81 : vector<1x8x8x3xi32> to vector<1x8x8x3xf32>
    %c0_i32_50 = arith.constant 0 : i32
    %83 = vector.broadcast %c0_i32_50 : i32 to vector<1x8x8x3xi32>
    %84 = arith.cmpi eq, %78, %83 : vector<1x8x8x3xi32>
    %cst_51 = arith.constant 0.000000e+00 : f32
    %85 = vector.broadcast %cst_51 : f32 to vector<1x8x8x3xf32>
    %86 = arith.select %84, %85, %77 : vector<1x8x8x3xi1>, vector<1x8x8x3xf32>
    %87 = arith.addf %86, %82 : vector<1x8x8x3xf32>
    %cst_52 = arith.constant 1.000000e+00 : f32
    %88 = vector.broadcast %cst_52 : f32 to vector<1x8x8x3xf32>
    %89 = arith.subf %88, %86 : vector<1x8x8x3xf32>
    %cst_53 = arith.constant 1.000000e+00 : f32
    %90 = vector.broadcast %cst_53 : f32 to vector<1x8x8x3xf32>
    %91 = arith.subf %90, %87 : vector<1x8x8x3xf32>
    %cst_54 = arith.constant 1.000000e+30 : f32
    %92 = vector.broadcast %cst_54 : f32 to vector<1x8x8x3xf32>
    %93 = arith.mulf %91, %92 : vector<1x8x8x3xf32>
    %94 = arith.subf %70, %93 : vector<1x8x8x3xf32>
    %cst_55 = arith.constant 1.000000e+00 : f32
    %95 = vector.broadcast %cst_55 : f32 to vector<1x8x8x3xf32>
    %96 = arith.subf %95, %89 : vector<1x8x8x3xf32>
    %cst_56 = arith.constant 1.000000e+30 : f32
    %97 = vector.broadcast %cst_56 : f32 to vector<1x8x8x3xf32>
    %98 = arith.mulf %96, %97 : vector<1x8x8x3xf32>
    %99 = arith.subf %70, %98 : vector<1x8x8x3xf32>
    %cst_57 = arith.constant dense<0xFF800000> : vector<1x8x8xf32>
    %100 = vector.multi_reduction <maximumf>, %94, %cst_57 [3] : vector<1x8x8x3xf32> to vector<1x8x8xf32>
    %101 = vector.shape_cast %100 : vector<1x8x8xf32> to vector<1x8x8x1xf32>
    %102 = vector.broadcast %101 : vector<1x8x8x1xf32> to vector<1x8x8x3xf32>
    %103 = arith.subf %94, %102 : vector<1x8x8x3xf32>
    %104 = math.exp %103 : vector<1x8x8x3xf32>
    %cst_58 = arith.constant dense<0.000000e+00> : vector<1x8x8xf32>
    %105 = vector.multi_reduction <add>, %104, %cst_58 [3] : vector<1x8x8x3xf32> to vector<1x8x8xf32>
    %106 = vector.shape_cast %105 : vector<1x8x8xf32> to vector<1x8x8x1xf32>
    %107 = math.log %106 : vector<1x8x8x1xf32>
    %108 = vector.broadcast %107 : vector<1x8x8x1xf32> to vector<1x8x8x3xf32>
    %109 = arith.subf %103, %108 : vector<1x8x8x3xf32>
    %110 = arith.mulf %109, %86 : vector<1x8x8x3xf32>
    %cst_59 = arith.constant dense<0.000000e+00> : vector<1x8x8xf32>
    %111 = vector.multi_reduction <add>, %110, %cst_59 [3] : vector<1x8x8x3xf32> to vector<1x8x8xf32>
    %cst_60 = arith.constant 0.000000e+00 : f32
    %112 = vector.broadcast %cst_60 : f32 to vector<1x8x8xf32>
    %113 = arith.subf %112, %111 : vector<1x8x8xf32>
    %cst_61 = arith.constant dense<0xFF800000> : vector<1x8x8xf32>
    %114 = vector.multi_reduction <maximumf>, %99, %cst_61 [3] : vector<1x8x8x3xf32> to vector<1x8x8xf32>
    %115 = vector.shape_cast %114 : vector<1x8x8xf32> to vector<1x8x8x1xf32>
    %116 = vector.broadcast %115 : vector<1x8x8x1xf32> to vector<1x8x8x3xf32>
    %117 = arith.subf %99, %116 : vector<1x8x8x3xf32>
    %118 = math.exp %117 : vector<1x8x8x3xf32>
    %cst_62 = arith.constant dense<0.000000e+00> : vector<1x8x8xf32>
    %119 = vector.multi_reduction <add>, %118, %cst_62 [3] : vector<1x8x8x3xf32> to vector<1x8x8xf32>
    %120 = vector.shape_cast %119 : vector<1x8x8xf32> to vector<1x8x8x1xf32>
    %121 = math.log %120 : vector<1x8x8x1xf32>
    %122 = vector.broadcast %121 : vector<1x8x8x1xf32> to vector<1x8x8x3xf32>
    %123 = arith.subf %117, %122 : vector<1x8x8x3xf32>
    %124 = arith.mulf %123, %82 : vector<1x8x8x3xf32>
    %cst_63 = arith.constant dense<0.000000e+00> : vector<1x8x8xf32>
    %125 = vector.multi_reduction <add>, %124, %cst_63 [3] : vector<1x8x8x3xf32> to vector<1x8x8xf32>
    %cst_64 = arith.constant 0.000000e+00 : f32
    %126 = vector.broadcast %cst_64 : f32 to vector<1x8x8xf32>
    %127 = arith.subf %126, %125 : vector<1x8x8xf32>
    %128 = tpu.iota {dimensions = array<i32: 1>} : vector<1x8x8xi32>
    %129 = tpu.iota {dimensions = array<i32: 2>} : vector<1x8x8xi32>
    %c4_i32 = arith.constant 4 : i32
    %130 = vector.broadcast %c4_i32 : i32 to vector<1x8x8xi32>
    %131 = arith.cmpi slt, %128, %130 : vector<1x8x8xi32>
    %c4_i32_65 = arith.constant 4 : i32
    %132 = vector.broadcast %c4_i32_65 : i32 to vector<1x8x8xi32>
    %133 = arith.cmpi slt, %129, %132 : vector<1x8x8xi32>
    %134 = arith.andi %131, %133 : vector<1x8x8xi1>
    %135 = arith.cmpi ne, %128, %129 : vector<1x8x8xi32>
    %136 = arith.andi %134, %135 : vector<1x8x8xi1>
    %137 = arith.extui %136 : vector<1x8x8xi1> to vector<1x8x8xi32>
    %138 = arith.sitofp %137 : vector<1x8x8xi32> to vector<1x8x8xf32>
    %139 = arith.addf %113, %127 : vector<1x8x8xf32>
    %140 = arith.mulf %139, %138 : vector<1x8x8xf32>
    %cst_66 = arith.constant dense<0.000000e+00> : vector<1x8xf32>
    %141 = vector.multi_reduction <add>, %140, %cst_66 [2] : vector<1x8x8xf32> to vector<1x8xf32>
    %142 = vector.shape_cast %141 : vector<1x8xf32> to vector<1x8x1xf32>
    %cst_67 = arith.constant dense<0.000000e+00> : vector<1x1xf32>
    %143 = vector.multi_reduction <add>, %142, %cst_67 [1] : vector<1x8x1xf32> to vector<1x1xf32>
    %144 = vector.shape_cast %143 : vector<1x1xf32> to vector<1x1x1xf32>
    %cst_68 = arith.constant dense<0.000000e+00> : vector<1x1xf32>
    %145 = vector.multi_reduction <add>, %144, %cst_68 [0] : vector<1x1x1xf32> to vector<1x1xf32>
    %146 = vector.shape_cast %145 : vector<1x1xf32> to vector<1x1x1xf32>
    %147 = vector.shape_cast %146 : vector<1x1x1xf32> to vector<1x1xf32>
    %cst_69 = arith.constant 0.0833333358 : f32
    %148 = vector.broadcast %cst_69 : f32 to vector<1x1xf32>
    %149 = arith.mulf %147, %148 : vector<1x1xf32>
    %150 = vector.shape_cast %149 : vector<1x1xf32> to vector<1x1xf32>
    %151 = vector.broadcast %150 : vector<1x1xf32> to vector<1x128xf32>
    %c0_70 = arith.constant 0 : index
    %c0_71 = arith.constant 0 : index
    %c0_72 = arith.constant 0 : index
    %152 = vector.load %arg5[%c0_70, %c0_71, %c0_72] : memref<1x1x128xf32, #tpu.memory_space<vmem>>, vector<1x1x128xf32>
    %153 = vector.shape_cast %152 : vector<1x1x128xf32> to vector<1x128xf32>
    %154 = vector.shape_cast %151 : vector<1x128xf32> to vector<1x1x128xf32>
    tpu.vector_store %arg5[%c0_70, %c0_71, %c0_72], %154 {strides = array<i32>} : memref<1x1x128xf32, #tpu.memory_space<vmem>>, vector<1x1x128xf32>,
    return
  }
  func.func @transform_0(%arg0: i32) -> (i32, i32, i32) {
    %c0_i32 = arith.constant 0 : i32
    %c0_i32_0 = arith.constant 0 : i32
    %c0_i32_1 = arith.constant 0 : i32
    return %arg0, %c0_i32, %c0_i32_0 : i32, i32, i32
  }
  func.func @transform_1(%arg0: i32) -> (i32, i32, i32, i32) {
    %c0_i32 = arith.constant 0 : i32
    %c0_i32_0 = arith.constant 0 : i32
    %c0_i32_1 = arith.constant 0 : i32
    %c0_i32_2 = arith.constant 0 : i32
    return %arg0, %c0_i32, %c0_i32_0, %c0_i32_1 : i32, i32, i32, i32
  }
  func.func @transform_2(%arg0: i32) -> (i32, i32, i32, i32) {
    %c0_i32 = arith.constant 0 : i32
    %c0_i32_0 = arith.constant 0 : i32
    %c0_i32_1 = arith.constant 0 : i32
    %c0_i32_2 = arith.constant 0 : i32
    return %arg0, %c0_i32, %c0_i32_0, %c0_i32_1 : i32, i32, i32, i32
  }
  func.func @transform_3(%arg0: i32) -> (i32, i32, i32, i32) {
    %c0_i32 = arith.constant 0 : i32
    %c0_i32_0 = arith.constant 0 : i32
    %c0_i32_1 = arith.constant 0 : i32
    %c0_i32_2 = arith.constant 0 : i32
    return %arg0, %c0_i32, %c0_i32_0, %c0_i32_1 : i32, i32, i32, i32
  }
  func.func @transform_4(%arg0: i32) -> (i32, i32, i32) {
    %c0_i32 = arith.constant 0 : i32
    %c0_i32_0 = arith.constant 0 : i32
    %c0_i32_1 = arith.constant 0 : i32
    return %arg0, %c0_i32, %c0_i32_0 : i32, i32, i32
  }
}

</mosaic_0001>

<llo_original>
// kernel: forward.1
$region0: #{forward.1}
  #allocation0 [shape = 'u32[]', space=smem, size = 0x4, offset = 0x4, fixed_abs, tag = 'smem constant byte address 0x4 - core index']
  #allocation1 [shape = 'u32[144,128]{1,0:T(1,128)}', space=vmem, size = 0x12000, scoped, tag = 'internal scratch']
  %s0 = inlined_call_operand.vmem [shape: f32[2,8,128], index: 0, kind: input, shape index: {}]
  %s1 = inlined_call_operand.vmem [shape: f32[2,10,3,128], index: 1, kind: input, shape index: {}]
  %s2 = inlined_call_operand.vmem [shape: f32[2,8,8,3], index: 2, kind: input, shape index: {}]
  %s3 = inlined_call_operand.vmem [shape: f32[2,8,8,3], index: 3, kind: output, shape index: {0}]
  %s4 = inlined_call_operand.vmem [shape: f32[2,1,128], index: 4, kind: output, shape index: {1}]
  %5 = xla_tuple %s3, %s4
  %s6 = sld [smem:[#allocation0]]
  $region53: #{forward.1} parent=0
    _
  %s8 = ssub.s32 1, %s6
  %s9 = scalar_select 0, %s8, %s6
  loop: start=0, step=1, limit=4
  $region2: #{forward.1} parent=0 // loop_pre_header
    _
  $region3: #{forward.1} parent=0 // loop_header
    %s11 = sphi 0, %s15
    %p12 = scmp.ge.s32.totalorder %s11, 4
    %s21 = sphi 0, %s23
    %s24 = sphi 0, %s21
    %s25 = sphi 0, %s24
    %s41 = sphi 0, %s25
    %s47 = sphi 0, %s49
    %s50 = sphi 0, %s47
    %s51 = sphi 0, %s50
    %s67 = sphi 0, %s51
    %s73 = sphi 0, %s75
    %s76 = sphi 0, %s73
    %s77 = sphi 0, %s76
    %s93 = sphi 0, %s77
    %s99 = sphi 0, %s101
    %s102 = sphi 0, %s99
    %s103 = sphi 0, %s102
    %s119 = sphi 0, %s103
    %s125 = sphi 0, %s127
    %s128 = sphi 0, %s125
    %s129 = sphi 0, %s128
    %s145 = sphi 0, %s129
  $region4: #{forward.1} parent=0 // loop_header_branch
    %14 = sbr.rel (%p12) target = $region8
  $region5: #{forward.1} parent=0 // loop_body
    %s16 = ssub.s32 %s11, 1
    %s17 = ssub.s32 %s11, 2
    %s18 = sadd.s32 %s11, 1
    %s19 = ssub.s32 %s11, %s18
    %p20 = scmp.eq.s32.totalorder %s19, 0
    %s22 = sadd.s32 %s21, 1
    %s23 = scalar_select %p20, %s21, %s22
    %p26 = pneg %p20
    %p27 = scmp.eq.s32.totalorder %s11, 1
    %p28 = por %p26, %p27
    %p29 = scmp.ne.s32.totalorder %s21, %s24
    %p30 = scmp.eq.s32.totalorder %s11, 0
    %p31 = por %p29, %p30
    %p32 = scmp.ne.s32.totalorder %s21, %s24
    %p33 = scmp.eq.s32.totalorder %s16, 1
    %p34 = por %p32, %p33
    %p35 = scmp.ne.s32.totalorder %s24, %s25
    %p36 = scmp.eq.s32.totalorder %s16, 0
    %p37 = por %p35, %p36
    %p38 = scmp.ne.s32.totalorder %s24, %s25
    %p39 = scmp.eq.s32.totalorder %s17, 1
    %p40 = por %p38, %p39
    %p42 = scmp.ne.s32.totalorder %s25, %s41
    %p43 = scmp.eq.s32.totalorder %s17, 0
    %p44 = por %p42, %p43
    %s45 = ssub.s32 %s11, %s18
    %p46 = scmp.eq.s32.totalorder %s45, 0
    %s48 = sadd.s32 %s47, 1
    %s49 = scalar_select %p46, %s47, %s48
    %p52 = pneg %p46
    %p53 = scmp.eq.s32.totalorder %s11, 1
    %p54 = por %p52, %p53
    %p55 = scmp.ne.s32.totalorder %s47, %s50
    %p56 = scmp.eq.s32.totalorder %s11, 0
    %p57 = por %p55, %p56
    %p58 = scmp.ne.s32.totalorder %s47, %s50
    %p59 = scmp.eq.s32.totalorder %s16, 1
    %p60 = por %p58, %p59
    %p61 = scmp.ne.s32.totalorder %s50, %s51
    %p62 = scmp.eq.s32.totalorder %s16, 0
    %p63 = por %p61, %p62
    %p64 = scmp.ne.s32.totalorder %s50, %s51
    %p65 = scmp.eq.s32.totalorder %s17, 1
    %p66 = por %p64, %p65
    %p68 = scmp.ne.s32.totalorder %s51, %s67
    %p69 = scmp.eq.s32.totalorder %s17, 0
    %p70 = por %p68, %p69
    %s71 = ssub.s32 %s11, %s18
    %p72 = scmp.eq.s32.totalorder %s71, 0
    %s74 = sadd.s32 %s73, 1
    %s75 = scalar_select %p72, %s73, %s74
    %p78 = pneg %p72
    %p79 = scmp.eq.s32.totalorder %s11, 1
    %p80 = por %p78, %p79
    %p81 = scmp.ne.s32.totalorder %s73, %s76
    %p82 = scmp.eq.s32.totalorder %s11, 0
    %p83 = por %p81, %p82
    %p84 = scmp.ne.s32.totalorder %s73, %s76
    %p85 = scmp.eq.s32.totalorder %s16, 1
    %p86 = por %p84, %p85
    %p87 = scmp.ne.s32.totalorder %s76, %s77
    %p88 = scmp.eq.s32.totalorder %s16, 0
    %p89 = por %p87, %p88
    %p90 = scmp.ne.s32.totalorder %s76, %s77
    %p91 = scmp.eq.s32.totalorder %s17, 1
    %p92 = por %p90, %p91
    %p94 = scmp.ne.s32.totalorder %s77, %s93
    %p95 = scmp.eq.s32.totalorder %s17, 0
    %p96 = por %p94, %p95
    %s97 = ssub.s32 %s11, %s18
    %p98 = scmp.eq.s32.totalorder %s97, 0
    %s100 = sadd.s32 %s99, 1
    %s101 = scalar_select %p98, %s99, %s100
    %p104 = pneg %p98
    %p105 = scmp.eq.s32.totalorder %s11, 1
    %p106 = por %p104, %p105
    %p107 = scmp.ne.s32.totalorder %s99, %s102
    %p108 = scmp.eq.s32.totalorder %s11, 0
    %p109 = por %p107, %p108
    %p110 = scmp.ne.s32.totalorder %s99, %s102
    %p111 = scmp.eq.s32.totalorder %s16, 1
    %p112 = por %p110, %p111
    %p113 = scmp.ne.s32.totalorder %s102, %s103
    %p114 = scmp.eq.s32.totalorder %s16, 0
    %p115 = por %p113, %p114
    %p116 = scmp.ne.s32.totalorder %s102, %s103
    %p117 = scmp.eq.s32.totalorder %s17, 1
    %p118 = por %p116, %p117
    %p120 = scmp.ne.s32.totalorder %s103, %s119
    %p121 = scmp.eq.s32.totalorder %s17, 0
    %p122 = por %p120, %p121
    %s123 = ssub.s32 %s11, %s18
    %p124 = scmp.eq.s32.totalorder %s123, 0
    %s126 = sadd.s32 %s125, 1
    %s127 = scalar_select %p124, %s125, %s126
    %p130 = pneg %p124
    %p131 = scmp.eq.s32.totalorder %s11, 1
    %p132 = por %p130, %p131
    %p133 = scmp.ne.s32.totalorder %s125, %s128
    %p134 = scmp.eq.s32.totalorder %s11, 0
    %p135 = por %p133, %p134
    %p136 = scmp.ne.s32.totalorder %s125, %s128
    %p137 = scmp.eq.s32.totalorder %s16, 1
    %p138 = por %p136, %p137
    %p139 = scmp.ne.s32.totalorder %s128, %s129
    %p140 = scmp.eq.s32.totalorder %s16, 0
    %p141 = por %p139, %p140
    %p142 = scmp.ne.s32.totalorder %s128, %s129
    %p143 = scmp.eq.s32.totalorder %s17, 1
    %p144 = por %p142, %p143
    %p146 = scmp.ne.s32.totalorder %s129, %s145
    %p147 = scmp.eq.s32.totalorder %s17, 0
    %p148 = por %p146, %p147
    %p149 = scmp.le.s32.totalorder 1, %s11
    %p150 = scmp.lt.s32.totalorder %s11, 3
    %p151 = pnand %p149, %p150
    %p152 = pneg %p151
    // Predicated region
    $region9: #{forward.1} parent=5 // pred_check
      _
    $region10: #{forward.1} parent=5 // pred_check_branch
      %154 = sbr.rel (%p151) target = $region12
    $region11: #{forward.1} parent=5 // pred_region
      %s155 = ssub.s32 %s11, 1
    $region12: #{forward.1} parent=5 // pred_fallthru
      _
    %p156 = scmp.lt.s32.totalorder %s11, 2
    // Predicated region
    $region13: #{forward.1} parent=5 // pred_check
      %p157 = pneg %p156
    $region14: #{forward.1} parent=5 // pred_check_branch
      %159 = sbr.rel (%p157) target = $region16
    $region15: #{forward.1} parent=5 // pred_region
      // Predicated region
      $region17: #{forward.1} parent=15 // pred_check
        %p160 = pneg %p31
      $region18: #{forward.1} parent=15 // pred_check_branch
        %162 = sbr.rel (%p160) target = $region20
      $region19: #{forward.1} parent=15 // pred_region
        %p163 = scmp.lt.s32.totalorder %s11, 1
        %s164 = scalar_select %p163, %s11, 1
        %s165 = smul.addr %s164, 8
        %s166 = scalar_lea.vmem %s0, %s165
      $region20: #{forward.1} parent=15 // pred_fallthru
        _
      // Predicated region
      $region21: #{forward.1} parent=15 // pred_check
        %p167 = pneg %p57
      $region22: #{forward.1} parent=15 // pred_check_branch
        %169 = sbr.rel (%p167) target = $region24
      $region23: #{forward.1} parent=15 // pred_region
        %p170 = scmp.lt.s32.totalorder %s11, 1
        %s171 = scalar_select %p170, %s11, 1
        %s172 = smul.addr %s171, 10
        %s173 = smul.addr %s172, 4
        %s174 = scalar_lea.vmem %s1, %s173
      $region24: #{forward.1} parent=15 // pred_fallthru
        _
      // Predicated region
      $region25: #{forward.1} parent=15 // pred_check
        %p175 = pneg %p83
      $region26: #{forward.1} parent=15 // pred_check_branch
        %177 = sbr.rel (%p175) target = $region28
      $region27: #{forward.1} parent=15 // pred_region
        %p178 = scmp.lt.s32.totalorder %s11, 1
        %s179 = scalar_select %p178, %s11, 1
        %s180 = smul.addr %s179, 8
        %s181 = smul.addr %s180, 8
        %s182 = scalar_lea.vmem %s2, %s181
      $region28: #{forward.1} parent=15 // pred_fallthru
        _
    $region16: #{forward.1} parent=5 // pred_fallthru
      _
    %p183 = scmp.le.s32.totalorder 1, %s11
    %p184 = scmp.lt.s32.totalorder %s11, 3
    %p185 = pnand %p183, %p184
    %p186 = pneg %p185
    // Predicated region
    $region29: #{forward.1} parent=5 // pred_check
      _
    $region30: #{forward.1} parent=5 // pred_check_branch
      %188 = sbr.rel (%p185) target = $region32
    $region31: #{forward.1} parent=5 // pred_region
      %s189 = ssub.s32 %s11, 1
      %p190 = scmp.lt.s32.totalorder %s16, 1
      %s191 = scalar_select %p190, %s16, 1
      %s192 = smul.addr %s191, 8
      %s193 = scalar_lea.vmem %s0, %s192
      %p194 = pneg %p37
      %p195 = pneg %p34
      %p196 = scmp.lt.s32.totalorder %s16, 1
      %s197 = scalar_select %p196, %s16, 1
      %s198 = smul.addr %s197, 10
      %s199 = smul.addr %s198, 4
      %s200 = scalar_lea.vmem %s1, %s199
      %p201 = pneg %p63
      %p202 = pneg %p60
      %p203 = scmp.lt.s32.totalorder %s16, 1
      %s204 = scalar_select %p203, %s16, 1
      %s205 = smul.addr %s204, 8
      %s206 = smul.addr %s205, 8
      %s207 = scalar_lea.vmem %s2, %s206
      %p208 = pneg %p89
      %p209 = pneg %p86
      %p210 = pneg %p115
      %p211 = pneg %p112
      %p212 = scmp.lt.s32.totalorder %s16, 1
      %s213 = scalar_select %p212, %s16, 1
      %s214 = smul.addr %s213, 8
      %s215 = smul.addr %s214, 8
      %s216 = scalar_lea.vmem %s3, %s215
      %p217 = pneg %p141
      %p218 = pneg %p138
      %p219 = scmp.lt.s32.totalorder %s16, 1
      %s220 = scalar_select %p219, %s16, 1
      %s221 = scalar_lea.vmem %s4, %s220
      %p222 = scmp.lt.s32.totalorder %s16, 1
      %s223 = scalar_select %p222, %s16, 1
      %s224 = smul.addr %s223, 8
      %s225 = scalar_lea.vmem %s0, %s224
      %p226 = scmp.lt.s32.totalorder %s16, 1
      %s227 = scalar_select %p226, %s16, 1
      %s228 = smul.addr %s227, 10
      %s229 = smul.addr %s228, 4
      %s230 = scalar_lea.vmem %s1, %s229
      %p231 = scmp.lt.s32.totalorder %s16, 1
      %s232 = scalar_select %p231, %s16, 1
      %s233 = smul.addr %s232, 8
      %s234 = smul.addr %s233, 8
      %s235 = scalar_lea.vmem %s2, %s234
      %p236 = scmp.lt.s32.totalorder %s16, 1
      %s237 = scalar_select %p236, %s16, 1
      %s238 = smul.addr %s237, 8
      %s239 = smul.addr %s238, 8
      %s240 = scalar_lea.vmem %s3, %s239
      %p241 = scmp.lt.s32.totalorder %s16, 1
      %s242 = scalar_select %p241, %s16, 1
      %s243 = scalar_lea.vmem %s4, %s242
      %v244 = vld [vmem:[%s225] sm:$0xff]
      %v245 = vld [vmem:[%s230] sm:$0x7]
      %246 = vmatprep.subr.mxu0 0.0
      %247 = vmatpush1.xpose.msra.mxu0 %v245
      %248 = vmatprep.subr.mxu0 0.0
      %249 = vmatpush1.xpose.msra.mxu0 0.0
      %250 = vmatprep.subr.mxu0 0.0
      %251 = vmatpush1.xpose.msra.mxu0 0.0
      %252 = vmatprep.subr.mxu0 0.0
      %253 = vmatpush1.xpose.msra.mxu0 0.0
      %254 = vmatprep.subr.mxu0 0.0
      %255 = vmatpush1.xpose.msra.mxu0 0.0
      %256 = vmatprep.subr.mxu0 0.0
      %257 = vmatpush1.xpose.msra.mxu0 0.0
      %258 = vmatprep.subr.mxu0 0.0
      %259 = vmatpush1.xpose.msra.mxu0 0.0
      %260 = vmatprep.subr.mxu0 0.0
      %261 = vmatpush1.xpose.msra.mxu0 0.0
      %262 = vmatprep.subr.mxu0 0.0
      %263 = vmatpush1.xpose.msra.mxu0 0.0
      %264 = vmatprep.subr.mxu0 0.0
      %265 = vmatpush1.xpose.msra.mxu0 0.0
      %266 = vmatprep.subr.mxu0 0.0
      %267 = vmatpush1.xpose.msra.mxu0 0.0
      %268 = vmatprep.subr.mxu0 0.0
      %269 = vmatpush1.xpose.msra.mxu0 0.0
      %270 = vmatprep.subr.mxu0 0.0
      %271 = vmatpush1.xpose.msra.mxu0 0.0
      %272 = vmatprep.subr.mxu0 0.0
      %273 = vmatpush1.xpose.msra.mxu0 0.0
      %274 = vmatprep.subr.mxu0 0.0
      %275 = vmatpush1.xpose.msra.mxu0 0.0
      %276 = vmatprep.subr.mxu0 0.0
      %277 = vmatpush1.xpose.msra.mxu0 0.0
      %278 = vmatprep.subr.mxu0 0.0
      %279 = vmatpush1.xpose.msra.mxu0 0.0
      %280 = vmatprep.subr.mxu0 0.0
      %281 = vmatpush1.xpose.msra.mxu0 0.0
      %282 = vmatprep.subr.mxu0 0.0
      %283 = vmatpush1.xpose.msra.mxu0 0.0
      %284 = vmatprep.subr.mxu0 0.0
      %285 = vmatpush1.xpose.msra.mxu0 0.0
      %286 = vmatprep.subr.mxu0 0.0
      %287 = vmatpush1.xpose.msra.mxu0 0.0
      %288 = vmatprep.subr.mxu0 0.0
      %289 = vmatpush1.xpose.msra.mxu0 0.0
      %290 = vmatprep.subr.mxu0 0.0
      %291 = vmatpush1.xpose.msra.mxu0 0.0
      %292 = vmatprep.subr.mxu0 0.0
      %293 = vmatpush1.xpose.msra.mxu0 0.0
      %294 = vmatprep.subr.mxu0 0.0
      %295 = vmatpush1.xpose.msra.mxu0 0.0
      %296 = vmatprep.subr.mxu0 0.0
      %297 = vmatpush1.xpose.msra.mxu0 0.0
      %298 = vmatprep.subr.mxu0 0.0
      %299 = vmatpush1.xpose.msra.mxu0 0.0
      %300 = vmatprep.subr.mxu0 0.0
      %301 = vmatpush1.xpose.msra.mxu0 0.0
      %302 = vmatprep.subr.mxu0 0.0
      %303 = vmatpush1.xpose.msra.mxu0 0.0
      %304 = vmatprep.subr.mxu0 0.0
      %305 = vmatpush1.xpose.msra.mxu0 0.0
      %306 = vmatprep.subr.mxu0 0.0
      %307 = vmatpush1.xpose.msra.mxu0 0.0
      %308 = vmatprep.subr.mxu0 0.0
      %309 = vmatpush1.xpose.msra.mxu0 0.0
      %310 = vmatprep.mubr.f32.mxu0 0.0
      %311 = vmatmul.mubr.f32.gmra.mrb[0].mxu0 %v244
      %v312 = vpop.f32.mrb[0].mxu0
      %v313 = vadd.f32 0.0, %v312
      %v314 = vpop.f32.mrb[0].mxu0
      %315 = vdwg.mxu0
      %s316 = scalar_lea.vmem %s230, 20
      %v317 = vld [vmem:[%s316] sm:$0x7]
      %318 = vmatprep.subr.mxu0 0.0
      %319 = vmatpush1.xpose.msra.mxu0 %v317
      %320 = vmatprep.subr.mxu0 0.0
      %321 = vmatpush1.xpose.msra.mxu0 0.0
      %322 = vmatprep.subr.mxu0 0.0
      %323 = vmatpush1.xpose.msra.mxu0 0.0
      %324 = vmatprep.subr.mxu0 0.0
      %325 = vmatpush1.xpose.msra.mxu0 0.0
      %326 = vmatprep.subr.mxu0 0.0
      %327 = vmatpush1.xpose.msra.mxu0 0.0
      %328 = vmatprep.subr.mxu0 0.0
      %329 = vmatpush1.xpose.msra.mxu0 0.0
      %330 = vmatprep.subr.mxu0 0.0
      %331 = vmatpush1.xpose.msra.mxu0 0.0
      %332 = vmatprep.subr.mxu0 0.0
      %333 = vmatpush1.xpose.msra.mxu0 0.0
      %334 = vmatprep.subr.mxu0 0.0
      %335 = vmatpush1.xpose.msra.mxu0 0.0
      %336 = vmatprep.subr.mxu0 0.0
      %337 = vmatpush1.xpose.msra.mxu0 0.0
      %338 = vmatprep.subr.mxu0 0.0
      %339 = vmatpush1.xpose.msra.mxu0 0.0
      %340 = vmatprep.subr.mxu0 0.0
      %341 = vmatpush1.xpose.msra.mxu0 0.0
      %342 = vmatprep.subr.mxu0 0.0
      %343 = vmatpush1.xpose.msra.mxu0 0.0
      %344 = vmatprep.subr.mxu0 0.0
      %345 = vmatpush1.xpose.msra.mxu0 0.0
      %346 = vmatprep.subr.mxu0 0.0
      %347 = vmatpush1.xpose.msra.mxu0 0.0
      %348 = vmatprep.subr.mxu0 0.0
      %349 = vmatpush1.xpose.msra.mxu0 0.0
      %350 = vmatprep.subr.mxu0 0.0
      %351 = vmatpush1.xpose.msra.mxu0 0.0
      %352 = vmatprep.subr.mxu0 0.0
      %353 = vmatpush1.xpose.msra.mxu0 0.0
      %354 = vmatprep.subr.mxu0 0.0
      %355 = vmatpush1.xpose.msra.mxu0 0.0
      %356 = vmatprep.subr.mxu0 0.0
      %357 = vmatpush1.xpose.msra.mxu0 0.0
      %358 = vmatprep.subr.mxu0 0.0
      %359 = vmatpush1.xpose.msra.mxu0 0.0
      %360 = vmatprep.subr.mxu0 0.0
      %361 = vmatpush1.xpose.msra.mxu0 0.0
      %362 = vmatprep.subr.mxu0 0.0
      %363 = vmatpush1.xpose.msra.mxu0 0.0
      %364 = vmatprep.subr.mxu0 0.0
      %365 = vmatpush1.xpose.msra.mxu0 0.0
      %366 = vmatprep.subr.mxu0 0.0
      %367 = vmatpush1.xpose.msra.mxu0 0.0
      %368 = vmatprep.subr.mxu0 0.0
      %369 = vmatpush1.xpose.msra.mxu0 0.0
      %370 = vmatprep.subr.mxu0 0.0
      %371 = vmatpush1.xpose.msra.mxu0 0.0
      %372 = vmatprep.subr.mxu0 0.0
      %373 = vmatpush1.xpose.msra.mxu0 0.0
      %374 = vmatprep.subr.mxu0 0.0
      %375 = vmatpush1.xpose.msra.mxu0 0.0
      %376 = vmatprep.subr.mxu0 0.0
      %377 = vmatpush1.xpose.msra.mxu0 0.0
      %378 = vmatprep.subr.mxu0 0.0
      %379 = vmatpush1.xpose.msra.mxu0 0.0
      %380 = vmatprep.subr.mxu0 0.0
      %381 = vmatpush1.xpose.msra.mxu0 0.0
      %382 = vmatprep.mubr.f32.mxu0 0.0
      %383 = vmatmul.mubr.f32.gmra.mrb[0].mxu0 %v244
      %v384 = vpop.f32.mrb[0].mxu0
      %v385 = vadd.f32 0.0, %v384
      %v386 = vpop.f32.mrb[0].mxu0
      %387 = vdwg.mxu0
      %v389 = vcombine.high %v313, %v313
      %v391 = vunpack.c.l.s4 1966171168
      %v392 = vunpack.c.0.s8 %v391
      %v393 = vlaneseq
      %v394 = vshrl.u32 %v393, 7
      %v395 = vsub.s32 %v392, %v394
      %v396 = vrot.slane %v313, %v395
      %v398 = vunpack.c.l.s4 1966171168
      %v399 = vunpack.c.0.s8 %v398
      %v400 = vlaneseq
      %v401 = vshrl.u32 %v400, 7
      %v402 = vsub.s32 %v399, %v401
      %v403 = vrot.slane %v389, %v402
      %v404 = vcombine.high %v396, %v396
      %v405 = vcombine.high %v403, %v403
      %v407 = vunpack.c.l.s4 1966171168
      %v408 = vunpack.c.0.s8 %v407
      %v409 = vlaneseq
      %v410 = vshrl.u32 %v409, 7
      %v411 = vsub.s32 %v408, %v410
      %v412 = vrot.slane %v396, %v411
      %v414 = vunpack.c.l.s4 1966171168
      %v415 = vunpack.c.0.s8 %v414
      %v416 = vlaneseq
      %v417 = vshrl.u32 %v416, 7
      %v418 = vsub.s32 %v415, %v417
      %v419 = vrot.slane %v403, %v418
      %v421 = vunpack.c.l.s4 1966171168
      %v422 = vunpack.c.0.s8 %v421
      %v423 = vlaneseq
      %v424 = vshrl.u32 %v423, 7
      %v425 = vsub.s32 %v422, %v424
      %v426 = vrot.slane %v404, %v425
      %v428 = vunpack.c.l.s4 1966171168
      %v429 = vunpack.c.0.s8 %v428
      %v430 = vlaneseq
      %v431 = vshrl.u32 %v430, 7
      %v432 = vsub.s32 %v429, %v431
      %v433 = vrot.slane %v405, %v432
      %v434 = vcombine.high %v412, %v412
      %v435 = vcombine.high %v419, %v419
      %v436 = vcombine.high %v426, %v426
      %v437 = vcombine.high %v433, %v433
      %v438 = vlaneseq
      %v439 = vshrl.u32 %v438, 7
      %v440 = vsub.s32 0, %v439
      %v441 = vrot.slane %v412, %v440
      %v442 = vlaneseq
      %v443 = vshrl.u32 %v442, 7
      %v444 = vsub.s32 0, %v443
      %v445 = vrot.slane %v426, %v444
      %v446 = vlaneseq
      %v447 = vshrl.u32 %v446, 7
      %v448 = vsub.s32 0, %v447
      %v449 = vrot.slane %v434, %v448
      %v450 = vlaneseq
      %v451 = vshrl.u32 %v450, 7
      %v452 = vsub.s32 0, %v451
      %v453 = vrot.slane %v436, %v452
      %v454 = vlaneseq
      %v455 = vshrl.u32 %v454, 7
      %v456 = vsub.s32 0, %v455
      %v457 = vrot.slane %v419, %v456
      %v458 = vlaneseq
      %v459 = vshrl.u32 %v458, 7
      %v460 = vsub.s32 0, %v459
      %v461 = vrot.slane %v433, %v460
      %v462 = vlaneseq
      %v463 = vshrl.u32 %v462, 7
      %v464 = vsub.s32 0, %v463
      %v465 = vrot.slane %v435, %v464
      %v466 = vlaneseq
      %v467 = vshrl.u32 %v466, 7
      %v468 = vsub.s32 0, %v467
      %v469 = vrot.slane %v437, %v468
      %v478 = vadd.f32 %v441, %v385
      %v479 = vadd.f32 %v445, %v385
      %v480 = vadd.f32 %v449, %v385
      %v481 = vadd.f32 %v453, %v385
      %v482 = vadd.f32 %v457, %v385
      %v483 = vadd.f32 %v461, %v385
      %v484 = vadd.f32 %v465, %v385
      %v485 = vadd.f32 %v469, %v385
      %s486 = scalar_lea.vmem %s230, 4
      %v487 = vld [vmem:[%s486] sm:$0x7]
      %488 = vmatprep.subr.mxu0 0.0
      %489 = vmatpush1.xpose.msra.mxu0 %v487
      %490 = vmatprep.subr.mxu0 0.0
      %491 = vmatpush1.xpose.msra.mxu0 0.0
      %492 = vmatprep.subr.mxu0 0.0
      %493 = vmatpush1.xpose.msra.mxu0 0.0
      %494 = vmatprep.subr.mxu0 0.0
      %495 = vmatpush1.xpose.msra.mxu0 0.0
      %496 = vmatprep.subr.mxu0 0.0
      %497 = vmatpush1.xpose.msra.mxu0 0.0
      %498 = vmatprep.subr.mxu0 0.0
      %499 = vmatpush1.xpose.msra.mxu0 0.0
      %500 = vmatprep.subr.mxu0 0.0
      %501 = vmatpush1.xpose.msra.mxu0 0.0
      %502 = vmatprep.subr.mxu0 0.0
      %503 = vmatpush1.xpose.msra.mxu0 0.0
      %504 = vmatprep.subr.mxu0 0.0
      %505 = vmatpush1.xpose.msra.mxu0 0.0
      %506 = vmatprep.subr.mxu0 0.0
      %507 = vmatpush1.xpose.msra.mxu0 0.0
      %508 = vmatprep.subr.mxu0 0.0
      %509 = vmatpush1.xpose.msra.mxu0 0.0
      %510 = vmatprep.subr.mxu0 0.0
      %511 = vmatpush1.xpose.msra.mxu0 0.0
      %512 = vmatprep.subr.mxu0 0.0
      %513 = vmatpush1.xpose.msra.mxu0 0.0
      %514 = vmatprep.subr.mxu0 0.0
      %515 = vmatpush1.xpose.msra.mxu0 0.0
      %516 = vmatprep.subr.mxu0 0.0
      %517 = vmatpush1.xpose.msra.mxu0 0.0
      %518 = vmatprep.subr.mxu0 0.0
      %519 = vmatpush1.xpose.msra.mxu0 0.0
      %520 = vmatprep.subr.mxu0 0.0
      %521 = vmatpush1.xpose.msra.mxu0 0.0
      %522 = vmatprep.subr.mxu0 0.0
      %523 = vmatpush1.xpose.msra.mxu0 0.0
      %524 = vmatprep.subr.mxu0 0.0
      %525 = vmatpush1.xpose.msra.mxu0 0.0
      %526 = vmatprep.subr.mxu0 0.0
      %527 = vmatpush1.xpose.msra.mxu0 0.0
      %528 = vmatprep.subr.mxu0 0.0
      %529 = vmatpush1.xpose.msra.mxu0 0.0
      %530 = vmatprep.subr.mxu0 0.0
      %531 = vmatpush1.xpose.msra.mxu0 0.0
      %532 = vmatprep.subr.mxu0 0.0
      %533 = vmatpush1.xpose.msra.mxu0 0.0
      %534 = vmatprep.subr.mxu0 0.0
      %535 = vmatpush1.xpose.msra.mxu0 0.0
      %536 = vmatprep.subr.mxu0 0.0
      %537 = vmatpush1.xpose.msra.mxu0 0.0
      %538 = vmatprep.subr.mxu0 0.0
      %539 = vmatpush1.xpose.msra.mxu0 0.0
      %540 = vmatprep.subr.mxu0 0.0
      %541 = vmatpush1.xpose.msra.mxu0 0.0
      %542 = vmatprep.subr.mxu0 0.0
      %543 = vmatpush1.xpose.msra.mxu0 0.0
      %544 = vmatprep.subr.mxu0 0.0
      %545 = vmatpush1.xpose.msra.mxu0 0.0
      %546 = vmatprep.subr.mxu0 0.0
      %547 = vmatpush1.xpose.msra.mxu0 0.0
      %548 = vmatprep.subr.mxu0 0.0
      %549 = vmatpush1.xpose.msra.mxu0 0.0
      %550 = vmatprep.subr.mxu0 0.0
      %551 = vmatpush1.xpose.msra.mxu0 0.0
      %552 = vmatprep.mubr.f32.mxu0 0.0
      %553 = vmatmul.mubr.f32.gmra.mrb[0].mxu0 %v244
      %v554 = vpop.f32.mrb[0].mxu0
      %v555 = vadd.f32 0.0, %v554
      %v556 = vpop.f32.mrb[0].mxu0
      %557 = vdwg.mxu0
      %s558 = scalar_lea.vmem %s230, 24
      %v559 = vld [vmem:[%s558] sm:$0x7]
      %560 = vmatprep.subr.mxu0 0.0
      %561 = vmatpush1.xpose.msra.mxu0 %v559
      %562 = vmatprep.subr.mxu0 0.0
      %563 = vmatpush1.xpose.msra.mxu0 0.0
      %564 = vmatprep.subr.mxu0 0.0
      %565 = vmatpush1.xpose.msra.mxu0 0.0
      %566 = vmatprep.subr.mxu0 0.0
      %567 = vmatpush1.xpose.msra.mxu0 0.0
      %568 = vmatprep.subr.mxu0 0.0
      %569 = vmatpush1.xpose.msra.mxu0 0.0
      %570 = vmatprep.subr.mxu0 0.0
      %571 = vmatpush1.xpose.msra.mxu0 0.0
      %572 = vmatprep.subr.mxu0 0.0
      %573 = vmatpush1.xpose.msra.mxu0 0.0
      %574 = vmatprep.subr.mxu0 0.0
      %575 = vmatpush1.xpose.msra.mxu0 0.0
      %576 = vmatprep.subr.mxu0 0.0
      %577 = vmatpush1.xpose.msra.mxu0 0.0
      %578 = vmatprep.subr.mxu0 0.0
      %579 = vmatpush1.xpose.msra.mxu0 0.0
      %580 = vmatprep.subr.mxu0 0.0
      %581 = vmatpush1.xpose.msra.mxu0 0.0
      %582 = vmatprep.subr.mxu0 0.0
      %583 = vmatpush1.xpose.msra.mxu0 0.0
      %584 = vmatprep.subr.mxu0 0.0
      %585 = vmatpush1.xpose.msra.mxu0 0.0
      %586 = vmatprep.subr.mxu0 0.0
      %587 = vmatpush1.xpose.msra.mxu0 0.0
      %588 = vmatprep.subr.mxu0 0.0
      %589 = vmatpush1.xpose.msra.mxu0 0.0
      %590 = vmatprep.subr.mxu0 0.0
      %591 = vmatpush1.xpose.msra.mxu0 0.0
      %592 = vmatprep.subr.mxu0 0.0
      %593 = vmatpush1.xpose.msra.mxu0 0.0
      %594 = vmatprep.subr.mxu0 0.0
      %595 = vmatpush1.xpose.msra.mxu0 0.0
      %596 = vmatprep.subr.mxu0 0.0
      %597 = vmatpush1.xpose.msra.mxu0 0.0
      %598 = vmatprep.subr.mxu0 0.0
      %599 = vmatpush1.xpose.msra.mxu0 0.0
      %600 = vmatprep.subr.mxu0 0.0
      %601 = vmatpush1.xpose.msra.mxu0 0.0
      %602 = vmatprep.subr.mxu0 0.0
      %603 = vmatpush1.xpose.msra.mxu0 0.0
      %604 = vmatprep.subr.mxu0 0.0
      %605 = vmatpush1.xpose.msra.mxu0 0.0
      %606 = vmatprep.subr.mxu0 0.0
      %607 = vmatpush1.xpose.msra.mxu0 0.0
      %608 = vmatprep.subr.mxu0 0.0
      %609 = vmatpush1.xpose.msra.mxu0 0.0
      %610 = vmatprep.subr.mxu0 0.0
      %611 = vmatpush1.xpose.msra.mxu0 0.0
      %612 = vmatprep.subr.mxu0 0.0
      %613 = vmatpush1.xpose.msra.mxu0 0.0
      %614 = vmatprep.subr.mxu0 0.0
      %615 = vmatpush1.xpose.msra.mxu0 0.0
      %616 = vmatprep.subr.mxu0 0.0
      %617 = vmatpush1.xpose.msra.mxu0 0.0
      %618 = vmatprep.subr.mxu0 0.0
      %619 = vmatpush1.xpose.msra.mxu0 0.0
      %620 = vmatprep.subr.mxu0 0.0
      %621 = vmatpush1.xpose.msra.mxu0 0.0
      %622 = vmatprep.subr.mxu0 0.0
      %623 = vmatpush1.xpose.msra.mxu0 0.0
      %624 = vmatprep.mubr.f32.mxu0 0.0
      %625 = vmatmul.mubr.f32.gmra.mrb[0].mxu0 %v244
      %v626 = vpop.f32.mrb[0].mxu0
      %v627 = vadd.f32 0.0, %v626
      %v628 = vpop.f32.mrb[0].mxu0
      %629 = vdwg.mxu0
      %v631 = vcombine.high %v555, %v555
      %v633 = vunpack.c.l.s4 1966171168
      %v634 = vunpack.c.0.s8 %v633
      %v635 = vlaneseq
      %v636 = vshrl.u32 %v635, 7
      %v637 = vsub.s32 %v634, %v636
      %v638 = vrot.slane %v555, %v637
      %v640 = vunpack.c.l.s4 1966171168
      %v641 = vunpack.c.0.s8 %v640
      %v642 = vlaneseq
      %v643 = vshrl.u32 %v642, 7
      %v644 = vsub.s32 %v641, %v643
      %v645 = vrot.slane %v631, %v644
      %v646 = vcombine.high %v638, %v638
      %v647 = vcombine.high %v645, %v645
      %v649 = vunpack.c.l.s4 1966171168
      %v650 = vunpack.c.0.s8 %v649
      %v651 = vlaneseq
      %v652 = vshrl.u32 %v651, 7
      %v653 = vsub.s32 %v650, %v652
      %v654 = vrot.slane %v638, %v653
      %v656 = vunpack.c.l.s4 1966171168
      %v657 = vunpack.c.0.s8 %v656
      %v658 = vlaneseq
      %v659 = vshrl.u32 %v658, 7
      %v660 = vsub.s32 %v657, %v659
      %v661 = vrot.slane %v645, %v660
      %v663 = vunpack.c.l.s4 1966171168
      %v664 = vunpack.c.0.s8 %v663
      %v665 = vlaneseq
      %v666 = vshrl.u32 %v665, 7
      %v667 = vsub.s32 %v664, %v666
      %v668 = vrot.slane %v646, %v667
      %v670 = vunpack.c.l.s4 1966171168
      %v671 = vunpack.c.0.s8 %v670
      %v672 = vlaneseq
      %v673 = vshrl.u32 %v672, 7
      %v674 = vsub.s32 %v671, %v673
      %v675 = vrot.slane %v647, %v674
      %v676 = vcombine.high %v654, %v654
      %v677 = vcombine.high %v661, %v661
      %v678 = vcombine.high %v668, %v668
      %v679 = vcombine.high %v675, %v675
      %v680 = vlaneseq
      %v681 = vshrl.u32 %v680, 7
      %v682 = vsub.s32 0, %v681
      %v683 = vrot.slane %v654, %v682
      %v684 = vlaneseq
      %v685 = vshrl.u32 %v684, 7
      %v686 = vsub.s32 0, %v685
      %v687 = vrot.slane %v668, %v686
      %v688 = vlaneseq
      %v689 = vshrl.u32 %v688, 7
      %v690 = vsub.s32 0, %v689
      %v691 = vrot.slane %v676, %v690
      %v692 = vlaneseq
      %v693 = vshrl.u32 %v692, 7
      %v694 = vsub.s32 0, %v693
      %v695 = vrot.slane %v678, %v694
      %v696 = vlaneseq
      %v697 = vshrl.u32 %v696, 7
      %v698 = vsub.s32 0, %v697
      %v699 = vrot.slane %v661, %v698
      %v700 = vlaneseq
      %v701 = vshrl.u32 %v700, 7
      %v702 = vsub.s32 0, %v701
      %v703 = vrot.slane %v675, %v702
      %v704 = vlaneseq
      %v705 = vshrl.u32 %v704, 7
      %v706 = vsub.s32 0, %v705
      %v707 = vrot.slane %v677, %v706
      %v708 = vlaneseq
      %v709 = vshrl.u32 %v708, 7
      %v710 = vsub.s32 0, %v709
      %v711 = vrot.slane %v679, %v710
      %v720 = vadd.f32 %v683, %v627
      %v721 = vadd.f32 %v687, %v627
      %v722 = vadd.f32 %v691, %v627
      %v723 = vadd.f32 %v695, %v627
      %v724 = vadd.f32 %v699, %v627
      %v725 = vadd.f32 %v703, %v627
      %v726 = vadd.f32 %v707, %v627
      %v727 = vadd.f32 %v711, %v627
      %v728 = vmax.f32 %v478, %v720
      %v729 = vmax.f32 %v479, %v721
      %v730 = vmax.f32 %v480, %v722
      %v731 = vmax.f32 %v481, %v723
      %v732 = vmax.f32 %v482, %v724
      %v733 = vmax.f32 %v483, %v725
      %v734 = vmax.f32 %v484, %v726
      %v735 = vmax.f32 %v485, %v727
      %s736 = scalar_lea.vmem %s230, 8
      %v737 = vld [vmem:[%s736] sm:$0x7]
      %738 = vmatprep.subr.mxu0 0.0
      %739 = vmatpush1.xpose.msra.mxu0 %v737
      %740 = vmatprep.subr.mxu0 0.0
      %741 = vmatpush1.xpose.msra.mxu0 0.0
      %742 = vmatprep.subr.mxu0 0.0
      %743 = vmatpush1.xpose.msra.mxu0 0.0
      %744 = vmatprep.subr.mxu0 0.0
      %745 = vmatpush1.xpose.msra.mxu0 0.0
      %746 = vmatprep.subr.mxu0 0.0
      %747 = vmatpush1.xpose.msra.mxu0 0.0
      %748 = vmatprep.subr.mxu0 0.0
      %749 = vmatpush1.xpose.msra.mxu0 0.0
      %750 = vmatprep.subr.mxu0 0.0
      %751 = vmatpush1.xpose.msra.mxu0 0.0
      %752 = vmatprep.subr.mxu0 0.0
      %753 = vmatpush1.xpose.msra.mxu0 0.0
      %754 = vmatprep.subr.mxu0 0.0
      %755 = vmatpush1.xpose.msra.mxu0 0.0
      %756 = vmatprep.subr.mxu0 0.0
      %757 = vmatpush1.xpose.msra.mxu0 0.0
      %758 = vmatprep.subr.mxu0 0.0
      %759 = vmatpush1.xpose.msra.mxu0 0.0
      %760 = vmatprep.subr.mxu0 0.0
      %761 = vmatpush1.xpose.msra.mxu0 0.0
      %762 = vmatprep.subr.mxu0 0.0
      %763 = vmatpush1.xpose.msra.mxu0 0.0
      %764 = vmatprep.subr.mxu0 0.0
      %765 = vmatpush1.xpose.msra.mxu0 0.0
      %766 = vmatprep.subr.mxu0 0.0
      %767 = vmatpush1.xpose.msra.mxu0 0.0
      %768 = vmatprep.subr.mxu0 0.0
      %769 = vmatpush1.xpose.msra.mxu0 0.0
      %770 = vmatprep.subr.mxu0 0.0
      %771 = vmatpush1.xpose.msra.mxu0 0.0
      %772 = vmatprep.subr.mxu0 0.0
      %773 = vmatpush1.xpose.msra.mxu0 0.0
      %774 = vmatprep.subr.mxu0 0.0
      %775 = vmatpush1.xpose.msra.mxu0 0.0
      %776 = vmatprep.subr.mxu0 0.0
      %777 = vmatpush1.xpose.msra.mxu0 0.0
      %778 = vmatprep.subr.mxu0 0.0
      %779 = vmatpush1.xpose.msra.mxu0 0.0
      %780 = vmatprep.subr.mxu0 0.0
      %781 = vmatpush1.xpose.msra.mxu0 0.0
      %782 = vmatprep.subr.mxu0 0.0
      %783 = vmatpush1.xpose.msra.mxu0 0.0
      %784 = vmatprep.subr.mxu0 0.0
      %785 = vmatpush1.xpose.msra.mxu0 0.0
      %786 = vmatprep.subr.mxu0 0.0
      %787 = vmatpush1.xpose.msra.mxu0 0.0
      %788 = vmatprep.subr.mxu0 0.0
      %789 = vmatpush1.xpose.msra.mxu0 0.0
      %790 = vmatprep.subr.mxu0 0.0
      %791 = vmatpush1.xpose.msra.mxu0 0.0
      %792 = vmatprep.subr.mxu0 0.0
      %793 = vmatpush1.xpose.msra.mxu0 0.0
      %794 = vmatprep.subr.mxu0 0.0
      %795 = vmatpush1.xpose.msra.mxu0 0.0
      %796 = vmatprep.subr.mxu0 0.0
      %797 = vmatpush1.xpose.msra.mxu0 0.0
      %798 = vmatprep.subr.mxu0 0.0
      %799 = vmatpush1.xpose.msra.mxu0 0.0
      %800 = vmatprep.subr.mxu0 0.0
      %801 = vmatpush1.xpose.msra.mxu0 0.0
      %802 = vmatprep.mubr.f32.mxu0 0.0
      %803 = vmatmul.mubr.f32.gmra.mrb[0].mxu0 %v244
      %v804 = vpop.f32.mrb[0].mxu0
      %v805 = vadd.f32 0.0, %v804
      %v806 = vpop.f32.mrb[0].mxu0
      %807 = vdwg.mxu0
      %s808 = scalar_lea.vmem %s230, 28
      %v809 = vld [vmem:[%s808] sm:$0x7]
      %810 = vmatprep.subr.mxu0 0.0
      %811 = vmatpush1.xpose.msra.mxu0 %v809
      %812 = vmatprep.subr.mxu0 0.0
      %813 = vmatpush1.xpose.msra.mxu0 0.0
      %814 = vmatprep.subr.mxu0 0.0
      %815 = vmatpush1.xpose.msra.mxu0 0.0
      %816 = vmatprep.subr.mxu0 0.0
      %817 = vmatpush1.xpose.msra.mxu0 0.0
      %818 = vmatprep.subr.mxu0 0.0
      %819 = vmatpush1.xpose.msra.mxu0 0.0
      %820 = vmatprep.subr.mxu0 0.0
      %821 = vmatpush1.xpose.msra.mxu0 0.0
      %822 = vmatprep.subr.mxu0 0.0
      %823 = vmatpush1.xpose.msra.mxu0 0.0
      %824 = vmatprep.subr.mxu0 0.0
      %825 = vmatpush1.xpose.msra.mxu0 0.0
      %826 = vmatprep.subr.mxu0 0.0
      %827 = vmatpush1.xpose.msra.mxu0 0.0
      %828 = vmatprep.subr.mxu0 0.0
      %829 = vmatpush1.xpose.msra.mxu0 0.0
      %830 = vmatprep.subr.mxu0 0.0
      %831 = vmatpush1.xpose.msra.mxu0 0.0
      %832 = vmatprep.subr.mxu0 0.0
      %833 = vmatpush1.xpose.msra.mxu0 0.0
      %834 = vmatprep.subr.mxu0 0.0
      %835 = vmatpush1.xpose.msra.mxu0 0.0
      %836 = vmatprep.subr.mxu0 0.0
      %837 = vmatpush1.xpose.msra.mxu0 0.0
      %838 = vmatprep.subr.mxu0 0.0
      %839 = vmatpush1.xpose.msra.mxu0 0.0
      %840 = vmatprep.subr.mxu0 0.0
      %841 = vmatpush1.xpose.msra.mxu0 0.0
      %842 = vmatprep.subr.mxu0 0.0
      %843 = vmatpush1.xpose.msra.mxu0 0.0
      %844 = vmatprep.subr.mxu0 0.0
      %845 = vmatpush1.xpose.msra.mxu0 0.0
      %846 = vmatprep.subr.mxu0 0.0
      %847 = vmatpush1.xpose.msra.mxu0 0.0
      %848 = vmatprep.subr.mxu0 0.0
      %849 = vmatpush1.xpose.msra.mxu0 0.0
      %850 = vmatprep.subr.mxu0 0.0
      %851 = vmatpush1.xpose.msra.mxu0 0.0
      %852 = vmatprep.subr.mxu0 0.0
      %853 = vmatpush1.xpose.msra.mxu0 0.0
      %854 = vmatprep.subr.mxu0 0.0
      %855 = vmatpush1.xpose.msra.mxu0 0.0
      %856 = vmatprep.subr.mxu0 0.0
      %857 = vmatpush1.xpose.msra.mxu0 0.0
      %858 = vmatprep.subr.mxu0 0.0
      %859 = vmatpush1.xpose.msra.mxu0 0.0
      %860 = vmatprep.subr.mxu0 0.0
      %861 = vmatpush1.xpose.msra.mxu0 0.0
      %862 = vmatprep.subr.mxu0 0.0
      %863 = vmatpush1.xpose.msra.mxu0 0.0
      %864 = vmatprep.subr.mxu0 0.0
      %865 = vmatpush1.xpose.msra.mxu0 0.0
      %866 = vmatprep.subr.mxu0 0.0
      %867 = vmatpush1.xpose.msra.mxu0 0.0
      %868 = vmatprep.subr.mxu0 0.0
      %869 = vmatpush1.xpose.msra.mxu0 0.0
      %870 = vmatprep.subr.mxu0 0.0
      %871 = vmatpush1.xpose.msra.mxu0 0.0
      %872 = vmatprep.subr.mxu0 0.0
      %873 = vmatpush1.xpose.msra.mxu0 0.0
      %874 = vmatprep.mubr.f32.mxu0 0.0
      %875 = vmatmul.mubr.f32.gmra.mrb[0].mxu0 %v244
      %v876 = vpop.f32.mrb[0].mxu0
      %v877 = vadd.f32 0.0, %v876
      %v878 = vpop.f32.mrb[0].mxu0
      %879 = vdwg.mxu0
      %v881 = vcombine.high %v805, %v805
      %v883 = vunpack.c.l.s4 1966171168
      %v884 = vunpack.c.0.s8 %v883
      %v885 = vlaneseq
      %v886 = vshrl.u32 %v885, 7
      %v887 = vsub.s32 %v884, %v886
      %v888 = vrot.slane %v805, %v887
      %v890 = vunpack.c.l.s4 1966171168
      %v891 = vunpack.c.0.s8 %v890
      %v892 = vlaneseq
      %v893 = vshrl.u32 %v892, 7
      %v894 = vsub.s32 %v891, %v893
      %v895 = vrot.slane %v881, %v894
      %v896 = vcombine.high %v888, %v888
      %v897 = vcombine.high %v895, %v895
      %v899 = vunpack.c.l.s4 1966171168
      %v900 = vunpack.c.0.s8 %v899
      %v901 = vlaneseq
      %v902 = vshrl.u32 %v901, 7
      %v903 = vsub.s32 %v900, %v902
      %v904 = vrot.slane %v888, %v903
      %v906 = vunpack.c.l.s4 1966171168
      %v907 = vunpack.c.0.s8 %v906
      %v908 = vlaneseq
      %v909 = vshrl.u32 %v908, 7
      %v910 = vsub.s32 %v907, %v909
      %v911 = vrot.slane %v895, %v910
      %v913 = vunpack.c.l.s4 1966171168
      %v914 = vunpack.c.0.s8 %v913
      %v915 = vlaneseq
      %v916 = vshrl.u32 %v915, 7
      %v917 = vsub.s32 %v914, %v916
      %v918 = vrot.slane %v896, %v917
      %v920 = vunpack.c.l.s4 1966171168
      %v921 = vunpack.c.0.s8 %v920
      %v922 = vlaneseq
      %v923 = vshrl.u32 %v922, 7
      %v924 = vsub.s32 %v921, %v923
      %v925 = vrot.slane %v897, %v924
      %v926 = vcombine.high %v904, %v904
      %v927 = vcombine.high %v911, %v911
      %v928 = vcombine.high %v918, %v918
      %v929 = vcombine.high %v925, %v925
      %v930 = vlaneseq
      %v931 = vshrl.u32 %v930, 7
      %v932 = vsub.s32 0, %v931
      %v933 = vrot.slane %v904, %v932
      %v934 = vlaneseq
      %v935 = vshrl.u32 %v934, 7
      %v936 = vsub.s32 0, %v935
      %v937 = vrot.slane %v918, %v936
      %v938 = vlaneseq
      %v939 = vshrl.u32 %v938, 7
      %v940 = vsub.s32 0, %v939
      %v941 = vrot.slane %v926, %v940
      %v942 = vlaneseq
      %v943 = vshrl.u32 %v942, 7
      %v944 = vsub.s32 0, %v943
      %v945 = vrot.slane %v928, %v944
      %v946 = vlaneseq
      %v947 = vshrl.u32 %v946, 7
      %v948 = vsub.s32 0, %v947
      %v949 = vrot.slane %v911, %v948
      %v950 = vlaneseq
      %v951 = vshrl.u32 %v950, 7
      %v952 = vsub.s32 0, %v951
      %v953 = vrot.slane %v925, %v952
      %v954 = vlaneseq
      %v955 = vshrl.u32 %v954, 7
      %v956 = vsub.s32 0, %v955
      %v957 = vrot.slane %v927, %v956
      %v958 = vlaneseq
      %v959 = vshrl.u32 %v958, 7
      %v960 = vsub.s32 0, %v959
      %v961 = vrot.slane %v929, %v960
      %v970 = vadd.f32 %v933, %v877
      %v971 = vadd.f32 %v937, %v877
      %v972 = vadd.f32 %v941, %v877
      %v973 = vadd.f32 %v945, %v877
      %v974 = vadd.f32 %v949, %v877
      %v975 = vadd.f32 %v953, %v877
      %v976 = vadd.f32 %v957, %v877
      %v977 = vadd.f32 %v961, %v877
      %v978 = vmax.f32 %v728, %v970
      %v979 = vmax.f32 %v729, %v971
      %v980 = vmax.f32 %v730, %v972
      %v981 = vmax.f32 %v731, %v973
      %v982 = vmax.f32 %v732, %v974
      %v983 = vmax.f32 %v733, %v975
      %v984 = vmax.f32 %v734, %v976
      %v985 = vmax.f32 %v735, %v977
      %s986 = scalar_lea.vmem %s230, 12
      %v987 = vld [vmem:[%s986] sm:$0x7]
      %988 = vmatprep.subr.mxu0 0.0
      %989 = vmatpush1.xpose.msra.mxu0 %v987
      %990 = vmatprep.subr.mxu0 0.0
      %991 = vmatpush1.xpose.msra.mxu0 0.0
      %992 = vmatprep.subr.mxu0 0.0
      %993 = vmatpush1.xpose.msra.mxu0 0.0
      %994 = vmatprep.subr.mxu0 0.0
      %995 = vmatpush1.xpose.msra.mxu0 0.0
      %996 = vmatprep.subr.mxu0 0.0
      %997 = vmatpush1.xpose.msra.mxu0 0.0
      %998 = vmatprep.subr.mxu0 0.0
      %999 = vmatpush1.xpose.msra.mxu0 0.0
      %1000 = vmatprep.subr.mxu0 0.0
      %1001 = vmatpush1.xpose.msra.mxu0 0.0
      %1002 = vmatprep.subr.mxu0 0.0
      %1003 = vmatpush1.xpose.msra.mxu0 0.0
      %1004 = vmatprep.subr.mxu0 0.0
      %1005 = vmatpush1.xpose.msra.mxu0 0.0
      %1006 = vmatprep.subr.mxu0 0.0
      %1007 = vmatpush1.xpose.msra.mxu0 0.0
      %1008 = vmatprep.subr.mxu0 0.0
      %1009 = vmatpush1.xpose.msra.mxu0 0.0
      %1010 = vmatprep.subr.mxu0 0.0
      %1011 = vmatpush1.xpose.msra.mxu0 0.0
      %1012 = vmatprep.subr.mxu0 0.0
      %1013 = vmatpush1.xpose.msra.mxu0 0.0
      %1014 = vmatprep.subr.mxu0 0.0
      %1015 = vmatpush1.xpose.msra.mxu0 0.0
      %1016 = vmatprep.subr.mxu0 0.0
      %1017 = vmatpush1.xpose.msra.mxu0 0.0
      %1018 = vmatprep.subr.mxu0 0.0
      %1019 = vmatpush1.xpose.msra.mxu0 0.0
      %1020 = vmatprep.subr.mxu0 0.0
      %1021 = vmatpush1.xpose.msra.mxu0 0.0
      %1022 = vmatprep.subr.mxu0 0.0
      %1023 = vmatpush1.xpose.msra.mxu0 0.0
      %1024 = vmatprep.subr.mxu0 0.0
      %1025 = vmatpush1.xpose.msra.mxu0 0.0
      %1026 = vmatprep.subr.mxu0 0.0
      %1027 = vmatpush1.xpose.msra.mxu0 0.0
      %1028 = vmatprep.subr.mxu0 0.0
      %1029 = vmatpush1.xpose.msra.mxu0 0.0
      %1030 = vmatprep.subr.mxu0 0.0
      %1031 = vmatpush1.xpose.msra.mxu0 0.0
      %1032 = vmatprep.subr.mxu0 0.0
      %1033 = vmatpush1.xpose.msra.mxu0 0.0
      %1034 = vmatprep.subr.mxu0 0.0
      %1035 = vmatpush1.xpose.msra.mxu0 0.0
      %1036 = vmatprep.subr.mxu0 0.0
      %1037 = vmatpush1.xpose.msra.mxu0 0.0
      %1038 = vmatprep.subr.mxu0 0.0
      %1039 = vmatpush1.xpose.msra.mxu0 0.0
      %1040 = vmatprep.subr.mxu0 0.0
      %1041 = vmatpush1.xpose.msra.mxu0 0.0
      %1042 = vmatprep.subr.mxu0 0.0
      %1043 = vmatpush1.xpose.msra.mxu0 0.0
      %1044 = vmatprep.subr.mxu0 0.0
      %1045 = vmatpush1.xpose.msra.mxu0 0.0
      %1046 = vmatprep.subr.mxu0 0.0
      %1047 = vmatpush1.xpose.msra.mxu0 0.0
      %1048 = vmatprep.subr.mxu0 0.0
      %1049 = vmatpush1.xpose.msra.mxu0 0.0
      %1050 = vmatprep.subr.mxu0 0.0
      %1051 = vmatpush1.xpose.msra.mxu0 0.0
      %1052 = vmatprep.mubr.f32.mxu0 0.0
      %1053 = vmatmul.mubr.f32.gmra.mrb[0].mxu0 %v244
      %v1054 = vpop.f32.mrb[0].mxu0
      %v1055 = vadd.f32 0.0, %v1054
      %v1056 = vpop.f32.mrb[0].mxu0
      %1057 = vdwg.mxu0
      %s1058 = scalar_lea.vmem %s230, 32
      %v1059 = vld [vmem:[%s1058] sm:$0x7]
      %1060 = vmatprep.subr.mxu0 0.0
      %1061 = vmatpush1.xpose.msra.mxu0 %v1059
      %1062 = vmatprep.subr.mxu0 0.0
      %1063 = vmatpush1.xpose.msra.mxu0 0.0
      %1064 = vmatprep.subr.mxu0 0.0
      %1065 = vmatpush1.xpose.msra.mxu0 0.0
      %1066 = vmatprep.subr.mxu0 0.0
      %1067 = vmatpush1.xpose.msra.mxu0 0.0
      %1068 = vmatprep.subr.mxu0 0.0
      %1069 = vmatpush1.xpose.msra.mxu0 0.0
      %1070 = vmatprep.subr.mxu0 0.0
      %1071 = vmatpush1.xpose.msra.mxu0 0.0
      %1072 = vmatprep.subr.mxu0 0.0
      %1073 = vmatpush1.xpose.msra.mxu0 0.0
      %1074 = vmatprep.subr.mxu0 0.0
      %1075 = vmatpush1.xpose.msra.mxu0 0.0
      %1076 = vmatprep.subr.mxu0 0.0
      %1077 = vmatpush1.xpose.msra.mxu0 0.0
      %1078 = vmatprep.subr.mxu0 0.0
      %1079 = vmatpush1.xpose.msra.mxu0 0.0
      %1080 = vmatprep.subr.mxu0 0.0
      %1081 = vmatpush1.xpose.msra.mxu0 0.0
      %1082 = vmatprep.subr.mxu0 0.0
      %1083 = vmatpush1.xpose.msra.mxu0 0.0
      %1084 = vmatprep.subr.mxu0 0.0
      %1085 = vmatpush1.xpose.msra.mxu0 0.0
      %1086 = vmatprep.subr.mxu0 0.0
      %1087 = vmatpush1.xpose.msra.mxu0 0.0
      %1088 = vmatprep.subr.mxu0 0.0
      %1089 = vmatpush1.xpose.msra.mxu0 0.0
      %1090 = vmatprep.subr.mxu0 0.0
      %1091 = vmatpush1.xpose.msra.mxu0 0.0
      %1092 = vmatprep.subr.mxu0 0.0
      %1093 = vmatpush1.xpose.msra.mxu0 0.0
      %1094 = vmatprep.subr.mxu0 0.0
      %1095 = vmatpush1.xpose.msra.mxu0 0.0
      %1096 = vmatprep.subr.mxu0 0.0
      %1097 = vmatpush1.xpose.msra.mxu0 0.0
      %1098 = vmatprep.subr.mxu0 0.0
      %1099 = vmatpush1.xpose.msra.mxu0 0.0
      %1100 = vmatprep.subr.mxu0 0.0
      %1101 = vmatpush1.xpose.msra.mxu0 0.0
      %1102 = vmatprep.subr.mxu0 0.0
      %1103 = vmatpush1.xpose.msra.mxu0 0.0
      %1104 = vmatprep.subr.mxu0 0.0
      %1105 = vmatpush1.xpose.msra.mxu0 0.0
      %1106 = vmatprep.subr.mxu0 0.0
      %1107 = vmatpush1.xpose.msra.mxu0 0.0
      %1108 = vmatprep.subr.mxu0 0.0
      %1109 = vmatpush1.xpose.msra.mxu0 0.0
      %1110 = vmatprep.subr.mxu0 0.0
      %1111 = vmatpush1.xpose.msra.mxu0 0.0
      %1112 = vmatprep.subr.mxu0 0.0
      %1113 = vmatpush1.xpose.msra.mxu0 0.0
      %1114 = vmatprep.subr.mxu0 0.0
      %1115 = vmatpush1.xpose.msra.mxu0 0.0
      %1116 = vmatprep.subr.mxu0 0.0
      %1117 = vmatpush1.xpose.msra.mxu0 0.0
      %1118 = vmatprep.subr.mxu0 0.0
      %1119 = vmatpush1.xpose.msra.mxu0 0.0
      %1120 = vmatprep.subr.mxu0 0.0
      %1121 = vmatpush1.xpose.msra.mxu0 0.0
      %1122 = vmatprep.subr.mxu0 0.0
      %1123 = vmatpush1.xpose.msra.mxu0 0.0
      %1124 = vmatprep.mubr.f32.mxu0 0.0
      %1125 = vmatmul.mubr.f32.gmra.mrb[0].mxu0 %v244
      %v1126 = vpop.f32.mrb[0].mxu0
      %v1127 = vadd.f32 0.0, %v1126
      %v1128 = vpop.f32.mrb[0].mxu0
      %1129 = vdwg.mxu0
      %v1131 = vcombine.high %v1055, %v1055
      %v1133 = vunpack.c.l.s4 1966171168
      %v1134 = vunpack.c.0.s8 %v1133
      %v1135 = vlaneseq
      %v1136 = vshrl.u32 %v1135, 7
      %v1137 = vsub.s32 %v1134, %v1136
      %v1138 = vrot.slane %v1055, %v1137
      %v1140 = vunpack.c.l.s4 1966171168
      %v1141 = vunpack.c.0.s8 %v1140
      %v1142 = vlaneseq
      %v1143 = vshrl.u32 %v1142, 7
      %v1144 = vsub.s32 %v1141, %v1143
      %v1145 = vrot.slane %v1131, %v1144
      %v1146 = vcombine.high %v1138, %v1138
      %v1147 = vcombine.high %v1145, %v1145
      %v1149 = vunpack.c.l.s4 1966171168
      %v1150 = vunpack.c.0.s8 %v1149
      %v1151 = vlaneseq
      %v1152 = vshrl.u32 %v1151, 7
      %v1153 = vsub.s32 %v1150, %v1152
      %v1154 = vrot.slane %v1138, %v1153
      %v1156 = vunpack.c.l.s4 1966171168
      %v1157 = vunpack.c.0.s8 %v1156
      %v1158 = vlaneseq
      %v1159 = vshrl.u32 %v1158, 7
      %v1160 = vsub.s32 %v1157, %v1159
      %v1161 = vrot.slane %v1145, %v1160
      %v1163 = vunpack.c.l.s4 1966171168
      %v1164 = vunpack.c.0.s8 %v1163
      %v1165 = vlaneseq
      %v1166 = vshrl.u32 %v1165, 7
      %v1167 = vsub.s32 %v1164, %v1166
      %v1168 = vrot.slane %v1146, %v1167
      %v1170 = vunpack.c.l.s4 1966171168
      %v1171 = vunpack.c.0.s8 %v1170
      %v1172 = vlaneseq
      %v1173 = vshrl.u32 %v1172, 7
      %v1174 = vsub.s32 %v1171, %v1173
      %v1175 = vrot.slane %v1147, %v1174
      %v1176 = vcombine.high %v1154, %v1154
      %v1177 = vcombine.high %v1161, %v1161
      %v1178 = vcombine.high %v1168, %v1168
      %v1179 = vcombine.high %v1175, %v1175
      %v1180 = vlaneseq
      %v1181 = vshrl.u32 %v1180, 7
      %v1182 = vsub.s32 0, %v1181
      %v1183 = vrot.slane %v1154, %v1182
      %v1184 = vlaneseq
      %v1185 = vshrl.u32 %v1184, 7
      %v1186 = vsub.s32 0, %v1185
      %v1187 = vrot.slane %v1168, %v1186
      %v1188 = vlaneseq
      %v1189 = vshrl.u32 %v1188, 7
      %v1190 = vsub.s32 0, %v1189
      %v1191 = vrot.slane %v1176, %v1190
      %v1192 = vlaneseq
      %v1193 = vshrl.u32 %v1192, 7
      %v1194 = vsub.s32 0, %v1193
      %v1195 = vrot.slane %v1178, %v1194
      %v1196 = vlaneseq
      %v1197 = vshrl.u32 %v1196, 7
      %v1198 = vsub.s32 0, %v1197
      %v1199 = vrot.slane %v1161, %v1198
      %v1200 = vlaneseq
      %v1201 = vshrl.u32 %v1200, 7
      %v1202 = vsub.s32 0, %v1201
      %v1203 = vrot.slane %v1175, %v1202
      %v1204 = vlaneseq
      %v1205 = vshrl.u32 %v1204, 7
      %v1206 = vsub.s32 0, %v1205
      %v1207 = vrot.slane %v1177, %v1206
      %v1208 = vlaneseq
      %v1209 = vshrl.u32 %v1208, 7
      %v1210 = vsub.s32 0, %v1209
      %v1211 = vrot.slane %v1179, %v1210
      %v1220 = vadd.f32 %v1183, %v1127
      %v1221 = vadd.f32 %v1187, %v1127
      %v1222 = vadd.f32 %v1191, %v1127
      %v1223 = vadd.f32 %v1195, %v1127
      %v1224 = vadd.f32 %v1199, %v1127
      %v1225 = vadd.f32 %v1203, %v1127
      %v1226 = vadd.f32 %v1207, %v1127
      %v1227 = vadd.f32 %v1211, %v1127
      %v1228 = vmax.f32 %v978, %v1220
      %v1229 = vmax.f32 %v979, %v1221
      %v1230 = vmax.f32 %v980, %v1222
      %v1231 = vmax.f32 %v981, %v1223
      %v1232 = vmax.f32 %v982, %v1224
      %v1233 = vmax.f32 %v983, %v1225
      %v1234 = vmax.f32 %v984, %v1226
      %v1235 = vmax.f32 %v985, %v1227
      %s1236 = scalar_lea.vmem %s230, 16
      %v1237 = vld [vmem:[%s1236] sm:$0x7]
      %1238 = vmatprep.subr.mxu0 0.0
      %1239 = vmatpush1.xpose.msra.mxu0 %v1237
      %1240 = vmatprep.subr.mxu0 0.0
      %1241 = vmatpush1.xpose.msra.mxu0 0.0
      %1242 = vmatprep.subr.mxu0 0.0
      %1243 = vmatpush1.xpose.msra.mxu0 0.0
      %1244 = vmatprep.subr.mxu0 0.0
      %1245 = vmatpush1.xpose.msra.mxu0 0.0
      %1246 = vmatprep.subr.mxu0 0.0
      %1247 = vmatpush1.xpose.msra.mxu0 0.0
      %1248 = vmatprep.subr.mxu0 0.0
      %1249 = vmatpush1.xpose.msra.mxu0 0.0
      %1250 = vmatprep.subr.mxu0 0.0
      %1251 = vmatpush1.xpose.msra.mxu0 0.0
      %1252 = vmatprep.subr.mxu0 0.0
      %1253 = vmatpush1.xpose.msra.mxu0 0.0
      %1254 = vmatprep.subr.mxu0 0.0
      %1255 = vmatpush1.xpose.msra.mxu0 0.0
      %1256 = vmatprep.subr.mxu0 0.0
      %1257 = vmatpush1.xpose.msra.mxu0 0.0
      %1258 = vmatprep.subr.mxu0 0.0
      %1259 = vmatpush1.xpose.msra.mxu0 0.0
      %1260 = vmatprep.subr.mxu0 0.0
      %1261 = vmatpush1.xpose.msra.mxu0 0.0
      %1262 = vmatprep.subr.mxu0 0.0
      %1263 = vmatpush1.xpose.msra.mxu0 0.0
      %1264 = vmatprep.subr.mxu0 0.0
      %1265 = vmatpush1.xpose.msra.mxu0 0.0
      %1266 = vmatprep.subr.mxu0 0.0
      %1267 = vmatpush1.xpose.msra.mxu0 0.0
      %1268 = vmatprep.subr.mxu0 0.0
      %1269 = vmatpush1.xpose.msra.mxu0 0.0
      %1270 = vmatprep.subr.mxu0 0.0
      %1271 = vmatpush1.xpose.msra.mxu0 0.0
      %1272 = vmatprep.subr.mxu0 0.0
      %1273 = vmatpush1.xpose.msra.mxu0 0.0
      %1274 = vmatprep.subr.mxu0 0.0
      %1275 = vmatpush1.xpose.msra.mxu0 0.0
      %1276 = vmatprep.subr.mxu0 0.0
      %1277 = vmatpush1.xpose.msra.mxu0 0.0
      %1278 = vmatprep.subr.mxu0 0.0
      %1279 = vmatpush1.xpose.msra.mxu0 0.0
      %1280 = vmatprep.subr.mxu0 0.0
      %1281 = vmatpush1.xpose.msra.mxu0 0.0
      %1282 = vmatprep.subr.mxu0 0.0
      %1283 = vmatpush1.xpose.msra.mxu0 0.0
      %1284 = vmatprep.subr.mxu0 0.0
      %1285 = vmatpush1.xpose.msra.mxu0 0.0
      %1286 = vmatprep.subr.mxu0 0.0
      %1287 = vmatpush1.xpose.msra.mxu0 0.0
      %1288 = vmatprep.subr.mxu0 0.0
      %1289 = vmatpush1.xpose.msra.mxu0 0.0
      %1290 = vmatprep.subr.mxu0 0.0
      %1291 = vmatpush1.xpose.msra.mxu0 0.0
      %1292 = vmatprep.subr.mxu0 0.0
      %1293 = vmatpush1.xpose.msra.mxu0 0.0
      %1294 = vmatprep.subr.mxu0 0.0
      %1295 = vmatpush1.xpose.msra.mxu0 0.0
      %1296 = vmatprep.subr.mxu0 0.0
      %1297 = vmatpush1.xpose.msra.mxu0 0.0
      %1298 = vmatprep.subr.mxu0 0.0
      %1299 = vmatpush1.xpose.msra.mxu0 0.0
      %1300 = vmatprep.subr.mxu0 0.0
      %1301 = vmatpush1.xpose.msra.mxu0 0.0
      %1302 = vmatprep.mubr.f32.mxu0 0.0
      %1303 = vmatmul.mubr.f32.gmra.mrb[0].mxu0 %v244
      %v1304 = vpop.f32.mrb[0].mxu0
      %v1305 = vadd.f32 0.0, %v1304
      %v1306 = vpop.f32.mrb[0].mxu0
      %1307 = vdwg.mxu0
      %s1308 = scalar_lea.vmem %s230, 36
      %v1309 = vld [vmem:[%s1308] sm:$0x7]
      %1310 = vmatprep.subr.mxu0 0.0
      %1311 = vmatpush1.xpose.msra.mxu0 %v1309
      %1312 = vmatprep.subr.mxu0 0.0
      %1313 = vmatpush1.xpose.msra.mxu0 0.0
      %1314 = vmatprep.subr.mxu0 0.0
      %1315 = vmatpush1.xpose.msra.mxu0 0.0
      %1316 = vmatprep.subr.mxu0 0.0
      %1317 = vmatpush1.xpose.msra.mxu0 0.0
      %1318 = vmatprep.subr.mxu0 0.0
      %1319 = vmatpush1.xpose.msra.mxu0 0.0
      %1320 = vmatprep.subr.mxu0 0.0
      %1321 = vmatpush1.xpose.msra.mxu0 0.0
      %1322 = vmatprep.subr.mxu0 0.0
      %1323 = vmatpush1.xpose.msra.mxu0 0.0
      %1324 = vmatprep.subr.mxu0 0.0
      %1325 = vmatpush1.xpose.msra.mxu0 0.0
      %1326 = vmatprep.subr.mxu0 0.0
      %1327 = vmatpush1.xpose.msra.mxu0 0.0
      %1328 = vmatprep.subr.mxu0 0.0
      %1329 = vmatpush1.xpose.msra.mxu0 0.0
      %1330 = vmatprep.subr.mxu0 0.0
      %1331 = vmatpush1.xpose.msra.mxu0 0.0
      %1332 = vmatprep.subr.mxu0 0.0
      %1333 = vmatpush1.xpose.msra.mxu0 0.0
      %1334 = vmatprep.subr.mxu0 0.0
      %1335 = vmatpush1.xpose.msra.mxu0 0.0
      %1336 = vmatprep.subr.mxu0 0.0
      %1337 = vmatpush1.xpose.msra.mxu0 0.0
      %1338 = vmatprep.subr.mxu0 0.0
      %1339 = vmatpush1.xpose.msra.mxu0 0.0
      %1340 = vmatprep.subr.mxu0 0.0
      %1341 = vmatpush1.xpose.msra.mxu0 0.0
      %1342 = vmatprep.subr.mxu0 0.0
      %1343 = vmatpush1.xpose.msra.mxu0 0.0
      %1344 = vmatprep.subr.mxu0 0.0
      %1345 = vmatpush1.xpose.msra.mxu0 0.0
      %1346 = vmatprep.subr.mxu0 0.0
      %1347 = vmatpush1.xpose.msra.mxu0 0.0
      %1348 = vmatprep.subr.mxu0 0.0
      %1349 = vmatpush1.xpose.msra.mxu0 0.0
      %1350 = vmatprep.subr.mxu0 0.0
      %1351 = vmatpush1.xpose.msra.mxu0 0.0
      %1352 = vmatprep.subr.mxu0 0.0
      %1353 = vmatpush1.xpose.msra.mxu0 0.0
      %1354 = vmatprep.subr.mxu0 0.0
      %1355 = vmatpush1.xpose.msra.mxu0 0.0
      %1356 = vmatprep.subr.mxu0 0.0
      %1357 = vmatpush1.xpose.msra.mxu0 0.0
      %1358 = vmatprep.subr.mxu0 0.0
      %1359 = vmatpush1.xpose.msra.mxu0 0.0
      %1360 = vmatprep.subr.mxu0 0.0
      %1361 = vmatpush1.xpose.msra.mxu0 0.0
      %1362 = vmatprep.subr.mxu0 0.0
      %1363 = vmatpush1.xpose.msra.mxu0 0.0
      %1364 = vmatprep.subr.mxu0 0.0
      %1365 = vmatpush1.xpose.msra.mxu0 0.0
      %1366 = vmatprep.subr.mxu0 0.0
      %1367 = vmatpush1.xpose.msra.mxu0 0.0
      %1368 = vmatprep.subr.mxu0 0.0
      %1369 = vmatpush1.xpose.msra.mxu0 0.0
      %1370 = vmatprep.subr.mxu0 0.0
      %1371 = vmatpush1.xpose.msra.mxu0 0.0
      %1372 = vmatprep.subr.mxu0 0.0
      %1373 = vmatpush1.xpose.msra.mxu0 0.0
      %1374 = vmatprep.mubr.f32.mxu0 0.0
      %1375 = vmatmul.mubr.f32.gmra.mrb[0].mxu0 %v244
      %v1376 = vpop.f32.mrb[0].mxu0
      %v1377 = vadd.f32 0.0, %v1376
      %v1378 = vpop.f32.mrb[0].mxu0
      %1379 = vdwg.mxu0
      %v1381 = vcombine.high %v1305, %v1305
      %v1383 = vunpack.c.l.s4 1966171168
      %v1384 = vunpack.c.0.s8 %v1383
      %v1385 = vlaneseq
      %v1386 = vshrl.u32 %v1385, 7
      %v1387 = vsub.s32 %v1384, %v1386
      %v1388 = vrot.slane %v1305, %v1387
      %v1390 = vunpack.c.l.s4 1966171168
      %v1391 = vunpack.c.0.s8 %v1390
      %v1392 = vlaneseq
      %v1393 = vshrl.u32 %v1392, 7
      %v1394 = vsub.s32 %v1391, %v1393
      %v1395 = vrot.slane %v1381, %v1394
      %v1396 = vcombine.high %v1388, %v1388
      %v1397 = vcombine.high %v1395, %v1395
      %v1399 = vunpack.c.l.s4 1966171168
      %v1400 = vunpack.c.0.s8 %v1399
      %v1401 = vlaneseq
      %v1402 = vshrl.u32 %v1401, 7
      %v1403 = vsub.s32 %v1400, %v1402
      %v1404 = vrot.slane %v1388, %v1403
      %v1406 = vunpack.c.l.s4 1966171168
      %v1407 = vunpack.c.0.s8 %v1406
      %v1408 = vlaneseq
      %v1409 = vshrl.u32 %v1408, 7
      %v1410 = vsub.s32 %v1407, %v1409
      %v1411 = vrot.slane %v1395, %v1410
      %v1413 = vunpack.c.l.s4 1966171168
      %v1414 = vunpack.c.0.s8 %v1413
      %v1415 = vlaneseq
      %v1416 = vshrl.u32 %v1415, 7
      %v1417 = vsub.s32 %v1414, %v1416
      %v1418 = vrot.slane %v1396, %v1417
      %v1420 = vunpack.c.l.s4 1966171168
      %v1421 = vunpack.c.0.s8 %v1420
      %v1422 = vlaneseq
      %v1423 = vshrl.u32 %v1422, 7
      %v1424 = vsub.s32 %v1421, %v1423
      %v1425 = vrot.slane %v1397, %v1424
      %v1426 = vcombine.high %v1404, %v1404
      %v1427 = vcombine.high %v1411, %v1411
      %v1428 = vcombine.high %v1418, %v1418
      %v1429 = vcombine.high %v1425, %v1425
      %v1430 = vlaneseq
      %v1431 = vshrl.u32 %v1430, 7
      %v1432 = vsub.s32 0, %v1431
      %v1433 = vrot.slane %v1404, %v1432
      %v1434 = vlaneseq
      %v1435 = vshrl.u32 %v1434, 7
      %v1436 = vsub.s32 0, %v1435
      %v1437 = vrot.slane %v1418, %v1436
      %v1438 = vlaneseq
      %v1439 = vshrl.u32 %v1438, 7
      %v1440 = vsub.s32 0, %v1439
      %v1441 = vrot.slane %v1426, %v1440
      %v1442 = vlaneseq
      %v1443 = vshrl.u32 %v1442, 7
      %v1444 = vsub.s32 0, %v1443
      %v1445 = vrot.slane %v1428, %v1444
      %v1446 = vlaneseq
      %v1447 = vshrl.u32 %v1446, 7
      %v1448 = vsub.s32 0, %v1447
      %v1449 = vrot.slane %v1411, %v1448
      %v1450 = vlaneseq
      %v1451 = vshrl.u32 %v1450, 7
      %v1452 = vsub.s32 0, %v1451
      %v1453 = vrot.slane %v1425, %v1452
      %v1454 = vlaneseq
      %v1455 = vshrl.u32 %v1454, 7
      %v1456 = vsub.s32 0, %v1455
      %v1457 = vrot.slane %v1427, %v1456
      %v1458 = vlaneseq
      %v1459 = vshrl.u32 %v1458, 7
      %v1460 = vsub.s32 0, %v1459
      %v1461 = vrot.slane %v1429, %v1460
      %v1470 = vadd.f32 %v1433, %v1377
      %v1471 = vadd.f32 %v1437, %v1377
      %v1472 = vadd.f32 %v1441, %v1377
      %v1473 = vadd.f32 %v1445, %v1377
      %v1474 = vadd.f32 %v1449, %v1377
      %v1475 = vadd.f32 %v1453, %v1377
      %v1476 = vadd.f32 %v1457, %v1377
      %v1477 = vadd.f32 %v1461, %v1377
      %v1478 = vmax.f32 %v1228, %v1470
      %v1479 = vmax.f32 %v1229, %v1471
      %v1480 = vmax.f32 %v1230, %v1472
      %v1481 = vmax.f32 %v1231, %v1473
      %v1482 = vmax.f32 %v1232, %v1474
      %v1483 = vmax.f32 %v1233, %v1475
      %v1484 = vmax.f32 %v1234, %v1476
      %v1485 = vmax.f32 %v1235, %v1477
      %vm1486 = vcmask 23552
      %1487 = vst.msk [vmem:[%s240] sm:$0xff] %vm1486, %v1478
      %1488 = vst.msk [vmem:[%s240 + $0x8] sm:$0xff] %vm1486, %v1479
      %1489 = vst.msk [vmem:[%s240 + $0x10] sm:$0xff] %vm1486, %v1480
      %1490 = vst.msk [vmem:[%s240 + $0x18] sm:$0xff] %vm1486, %v1481
      %1491 = vst.msk [vmem:[%s240 + $0x20] sm:$0xff] %vm1486, %v1482
      %1492 = vst.msk [vmem:[%s240 + $0x28] sm:$0xff] %vm1486, %v1483
      %1493 = vst.msk [vmem:[%s240 + $0x30] sm:$0xff] %vm1486, %v1484
      %1494 = vst.msk [vmem:[%s240 + $0x38] sm:$0xff] %vm1486, %v1485
      %v1495 = vld [vmem:[%s235] sm:$0xff]
      %v1496 = vld [vmem:[%s235 + $0x8] sm:$0xff]
      %v1497 = vld [vmem:[%s235 + $0x10] sm:$0xff]
      %v1498 = vld [vmem:[%s235 + $0x18] sm:$0xff]
      %v1499 = vld [vmem:[%s235 + $0x20] sm:$0xff]
      %v1500 = vld [vmem:[%s235 + $0x28] sm:$0xff]
      %v1501 = vld [vmem:[%s235 + $0x30] sm:$0xff]
      %v1502 = vld [vmem:[%s235 + $0x38] sm:$0xff]
      %v1503 = vlaneseq
      %v1504 = vand.u32 %v1503, 127
      %vm1505 = vcmp.eq.s32.totalorder %v1504, 0
      %v1506 = vsel %vm1505, 1, 0
      %v1507 = vcvt.s32.f32 %v1506
      %v1508 = vsel %vm1505, 0.0, %v1495
      %v1509 = vsel %vm1505, 0.0, %v1496
      %v1510 = vsel %vm1505, 0.0, %v1497
      %v1511 = vsel %vm1505, 0.0, %v1498
      %v1512 = vsel %vm1505, 0.0, %v1499
      %v1513 = vsel %vm1505, 0.0, %v1500
      %v1514 = vsel %vm1505, 0.0, %v1501
      %v1515 = vsel %vm1505, 0.0, %v1502
      %v1516 = vadd.f32 %v1508, %v1507
      %v1517 = vadd.f32 %v1509, %v1507
      %v1518 = vadd.f32 %v1510, %v1507
      %v1519 = vadd.f32 %v1511, %v1507
      %v1520 = vadd.f32 %v1512, %v1507
      %v1521 = vadd.f32 %v1513, %v1507
      %v1522 = vadd.f32 %v1514, %v1507
      %v1523 = vadd.f32 %v1515, %v1507
      %v1524 = vsub.f32 1.0, %v1508
      %v1525 = vsub.f32 1.0, %v1509
      %v1526 = vsub.f32 1.0, %v1510
      %v1527 = vsub.f32 1.0, %v1511
      %v1528 = vsub.f32 1.0, %v1512
      %v1529 = vsub.f32 1.0, %v1513
      %v1530 = vsub.f32 1.0, %v1514
      %v1531 = vsub.f32 1.0, %v1515
      %v1532 = vsub.f32 1.0, %v1516
      %v1533 = vsub.f32 1.0, %v1517
      %v1534 = vsub.f32 1.0, %v1518
      %v1535 = vsub.f32 1.0, %v1519
      %v1536 = vsub.f32 1.0, %v1520
      %v1537 = vsub.f32 1.0, %v1521
      %v1538 = vsub.f32 1.0, %v1522
      %v1539 = vsub.f32 1.0, %v1523
      %v1540 = vmul.f32 %v1532, 1e+30
      %v1541 = vmul.f32 %v1533, 1e+30
      %v1542 = vmul.f32 %v1534, 1e+30
      %v1543 = vmul.f32 %v1535, 1e+30
      %v1544 = vmul.f32 %v1536, 1e+30
      %v1545 = vmul.f32 %v1537, 1e+30
      %v1546 = vmul.f32 %v1538, 1e+30
      %v1547 = vmul.f32 %v1539, 1e+30
      %v1548 = vsub.f32 %v1478, %v1540
      %v1549 = vsub.f32 %v1479, %v1541
      %v1550 = vsub.f32 %v1480, %v1542
      %v1551 = vsub.f32 %v1481, %v1543
      %v1552 = vsub.f32 %v1482, %v1544
      %v1553 = vsub.f32 %v1483, %v1545
      %v1554 = vsub.f32 %v1484, %v1546
      %v1555 = vsub.f32 %v1485, %v1547
      %v1556 = vsub.f32 1.0, %v1524
      %v1557 = vsub.f32 1.0, %v1525
      %v1558 = vsub.f32 1.0, %v1526
      %v1559 = vsub.f32 1.0, %v1527
      %v1560 = vsub.f32 1.0, %v1528
      %v1561 = vsub.f32 1.0, %v1529
      %v1562 = vsub.f32 1.0, %v1530
      %v1563 = vsub.f32 1.0, %v1531
      %v1564 = vmul.f32 %v1556, 1e+30
      %v1565 = vmul.f32 %v1557, 1e+30
      %v1566 = vmul.f32 %v1558, 1e+30
      %v1567 = vmul.f32 %v1559, 1e+30
      %v1568 = vmul.f32 %v1560, 1e+30
      %v1569 = vmul.f32 %v1561, 1e+30
      %v1570 = vmul.f32 %v1562, 1e+30
      %v1571 = vmul.f32 %v1563, 1e+30
      %v1572 = vsub.f32 %v1478, %v1564
      %v1573 = vsub.f32 %v1479, %v1565
      %v1574 = vsub.f32 %v1480, %v1566
      %v1575 = vsub.f32 %v1481, %v1567
      %v1576 = vsub.f32 %v1482, %v1568
      %v1577 = vsub.f32 %v1483, %v1569
      %v1578 = vsub.f32 %v1484, %v1570
      %v1579 = vsub.f32 %v1485, %v1571
      %v1580 = vsel %vm1486, %v1548, -inf
      %1581 = vmax.xlane.f32.xlu0 %v1580
      %v1582 = vpop.xlane.xlu0 %1581
      %v1583 = vsel %vm1486, %v1549, -inf
      %1584 = vmax.xlane.f32.xlu0 %v1583
      %v1585 = vpop.xlane.xlu0 %1584
      %v1586 = vsel %vm1486, %v1550, -inf
      %1587 = vmax.xlane.f32.xlu0 %v1586
      %v1588 = vpop.xlane.xlu0 %1587
      %v1589 = vsel %vm1486, %v1551, -inf
      %1590 = vmax.xlane.f32.xlu0 %v1589
      %v1591 = vpop.xlane.xlu0 %1590
      %v1592 = vsel %vm1486, %v1552, -inf
      %1593 = vmax.xlane.f32.xlu0 %v1592
      %v1594 = vpop.xlane.xlu0 %1593
      %v1595 = vsel %vm1486, %v1553, -inf
      %1596 = vmax.xlane.f32.xlu0 %v1595
      %v1597 = vpop.xlane.xlu0 %1596
      %v1598 = vsel %vm1486, %v1554, -inf
      %1599 = vmax.xlane.f32.xlu0 %v1598
      %v1600 = vpop.xlane.xlu0 %1599
      %v1601 = vsel %vm1486, %v1555, -inf
      %1602 = vmax.xlane.f32.xlu0 %v1601
      %v1603 = vpop.xlane.xlu0 %1602
      %v1604 = vsub.f32 %v1548, %v1582
      %v1605 = vsub.f32 %v1549, %v1585
      %v1606 = vsub.f32 %v1550, %v1588
      %v1607 = vsub.f32 %v1551, %v1591
      %v1608 = vsub.f32 %v1552, %v1594
      %v1609 = vsub.f32 %v1553, %v1597
      %v1610 = vsub.f32 %v1554, %v1600
      %v1611 = vsub.f32 %v1555, %v1603
      %v1612 = vmul.f32 %v1604, 1.442695
      %v1613 = vpow.pop %v1612
      %v1614 = vmul.f32 %v1605, 1.442695
      %v1615 = vpow.pop %v1614
      %v1616 = vmul.f32 %v1606, 1.442695
      %v1617 = vpow.pop %v1616
      %v1618 = vmul.f32 %v1607, 1.442695
      %v1619 = vpow.pop %v1618
      %v1620 = vmul.f32 %v1608, 1.442695
      %v1621 = vpow.pop %v1620
      %v1622 = vmul.f32 %v1609, 1.442695
      %v1623 = vpow.pop %v1622
      %v1624 = vmul.f32 %v1610, 1.442695
      %v1625 = vpow.pop %v1624
      %v1626 = vmul.f32 %v1611, 1.442695
      %v1627 = vpow.pop %v1626
      %v1628 = vsel %vm1486, %v1613, 0.0
      %1629 = vadd.xlane.f32.xlu0 %v1628
      %v1630 = vpop.xlane.xlu0 %1629
      %v1631 = vsel %vm1486, %v1615, 0.0
      %1632 = vadd.xlane.f32.xlu0 %v1631
      %v1633 = vpop.xlane.xlu0 %1632
      %v1634 = vsel %vm1486, %v1617, 0.0
      %1635 = vadd.xlane.f32.xlu0 %v1634
      %v1636 = vpop.xlane.xlu0 %1635
      %v1637 = vsel %vm1486, %v1619, 0.0
      %1638 = vadd.xlane.f32.xlu0 %v1637
      %v1639 = vpop.xlane.xlu0 %1638
      %v1640 = vsel %vm1486, %v1621, 0.0
      %1641 = vadd.xlane.f32.xlu0 %v1640
      %v1642 = vpop.xlane.xlu0 %1641
      %v1643 = vsel %vm1486, %v1623, 0.0
      %1644 = vadd.xlane.f32.xlu0 %v1643
      %v1645 = vpop.xlane.xlu0 %1644
      %v1646 = vsel %vm1486, %v1625, 0.0
      %1647 = vadd.xlane.f32.xlu0 %v1646
      %v1648 = vpop.xlane.xlu0 %1647
      %v1649 = vsel %vm1486, %v1627, 0.0
      %1650 = vadd.xlane.f32.xlu0 %v1649
      %v1651 = vpop.xlane.xlu0 %1650
      %v1652 = vlog2.pop %v1630
      %v1653 = vmul.f32 %v1652, 0.6931472
      %v1654 = vlog2.pop %v1633
      %v1655 = vmul.f32 %v1654, 0.6931472
      %v1656 = vlog2.pop %v1636
      %v1657 = vmul.f32 %v1656, 0.6931472
      %v1658 = vlog2.pop %v1639
      %v1659 = vmul.f32 %v1658, 0.6931472
      %v1660 = vlog2.pop %v1642
      %v1661 = vmul.f32 %v1660, 0.6931472
      %v1662 = vlog2.pop %v1645
      %v1663 = vmul.f32 %v1662, 0.6931472
      %v1664 = vlog2.pop %v1648
      %v1665 = vmul.f32 %v1664, 0.6931472
      %v1666 = vlog2.pop %v1651
      %v1667 = vmul.f32 %v1666, 0.6931472
      %v1668 = vsub.f32 %v1604, %v1653
      %v1669 = vsub.f32 %v1605, %v1655
      %v1670 = vsub.f32 %v1606, %v1657
      %v1671 = vsub.f32 %v1607, %v1659
      %v1672 = vsub.f32 %v1608, %v1661
      %v1673 = vsub.f32 %v1609, %v1663
      %v1674 = vsub.f32 %v1610, %v1665
      %v1675 = vsub.f32 %v1611, %v1667
      %v1676 = vmul.f32 %v1668, %v1508
      %v1677 = vmul.f32 %v1669, %v1509
      %v1678 = vmul.f32 %v1670, %v1510
      %v1679 = vmul.f32 %v1671, %v1511
      %v1680 = vmul.f32 %v1672, %v1512
      %v1681 = vmul.f32 %v1673, %v1513
      %v1682 = vmul.f32 %v1674, %v1514
      %v1683 = vmul.f32 %v1675, %v1515
      %v1684 = vsel %vm1486, %v1676, 0.0
      %1685 = vadd.xlane.f32.xlu0 %v1684
      %v1686 = vpop.xlane.xlu0 %1685
      %v1687 = vsel %vm1486, %v1677, 0.0
      %1688 = vadd.xlane.f32.xlu0 %v1687
      %v1689 = vpop.xlane.xlu0 %1688
      %v1690 = vsel %vm1486, %v1678, 0.0
      %1691 = vadd.xlane.f32.xlu0 %v1690
      %v1692 = vpop.xlane.xlu0 %1691
      %v1693 = vsel %vm1486, %v1679, 0.0
      %1694 = vadd.xlane.f32.xlu0 %v1693
      %v1695 = vpop.xlane.xlu0 %1694
      %v1696 = vsel %vm1486, %v1680, 0.0
      %1697 = vadd.xlane.f32.xlu0 %v1696
      %v1698 = vpop.xlane.xlu0 %1697
      %v1699 = vsel %vm1486, %v1681, 0.0
      %1700 = vadd.xlane.f32.xlu0 %v1699
      %v1701 = vpop.xlane.xlu0 %1700
      %v1702 = vsel %vm1486, %v1682, 0.0
      %1703 = vadd.xlane.f32.xlu0 %v1702
      %v1704 = vpop.xlane.xlu0 %1703
      %v1705 = vsel %vm1486, %v1683, 0.0
      %1706 = vadd.xlane.f32.xlu0 %v1705
      %v1707 = vpop.xlane.xlu0 %1706
      %v1708 = vsub.f32 0.0, %v1686
      %v1709 = vsub.f32 0.0, %v1689
      %v1710 = vsub.f32 0.0, %v1692
      %v1711 = vsub.f32 0.0, %v1695
      %v1712 = vsub.f32 0.0, %v1698
      %v1713 = vsub.f32 0.0, %v1701
      %v1714 = vsub.f32 0.0, %v1704
      %v1715 = vsub.f32 0.0, %v1707
      %v1716 = vsel %vm1486, %v1572, -inf
      %1717 = vmax.xlane.f32.xlu0 %v1716
      %v1718 = vpop.xlane.xlu0 %1717
      %v1719 = vsel %vm1486, %v1573, -inf
      %1720 = vmax.xlane.f32.xlu0 %v1719
      %v1721 = vpop.xlane.xlu0 %1720
      %v1722 = vsel %vm1486, %v1574, -inf
      %1723 = vmax.xlane.f32.xlu0 %v1722
      %v1724 = vpop.xlane.xlu0 %1723
      %v1725 = vsel %vm1486, %v1575, -inf
      %1726 = vmax.xlane.f32.xlu0 %v1725
      %v1727 = vpop.xlane.xlu0 %1726
      %v1728 = vsel %vm1486, %v1576, -inf
      %1729 = vmax.xlane.f32.xlu0 %v1728
      %v1730 = vpop.xlane.xlu0 %1729
      %v1731 = vsel %vm1486, %v1577, -inf
      %1732 = vmax.xlane.f32.xlu0 %v1731
      %v1733 = vpop.xlane.xlu0 %1732
      %v1734 = vsel %vm1486, %v1578, -inf
      %1735 = vmax.xlane.f32.xlu0 %v1734
      %v1736 = vpop.xlane.xlu0 %1735
      %v1737 = vsel %vm1486, %v1579, -inf
      %1738 = vmax.xlane.f32.xlu0 %v1737
      %v1739 = vpop.xlane.xlu0 %1738
      %v1740 = vsub.f32 %v1572, %v1718
      %v1741 = vsub.f32 %v1573, %v1721
      %v1742 = vsub.f32 %v1574, %v1724
      %v1743 = vsub.f32 %v1575, %v1727
      %v1744 = vsub.f32 %v1576, %v1730
      %v1745 = vsub.f32 %v1577, %v1733
      %v1746 = vsub.f32 %v1578, %v1736
      %v1747 = vsub.f32 %v1579, %v1739
      %v1748 = vmul.f32 %v1740, 1.442695
      %v1749 = vpow.pop %v1748
      %v1750 = vmul.f32 %v1741, 1.442695
      %v1751 = vpow.pop %v1750
      %v1752 = vmul.f32 %v1742, 1.442695
      %v1753 = vpow.pop %v1752
      %v1754 = vmul.f32 %v1743, 1.442695
      %v1755 = vpow.pop %v1754
      %v1756 = vmul.f32 %v1744, 1.442695
      %v1757 = vpow.pop %v1756
      %v1758 = vmul.f32 %v1745, 1.442695
      %v1759 = vpow.pop %v1758
      %v1760 = vmul.f32 %v1746, 1.442695
      %v1761 = vpow.pop %v1760
      %v1762 = vmul.f32 %v1747, 1.442695
      %v1763 = vpow.pop %v1762
      %v1764 = vsel %vm1486, %v1749, 0.0
      %1765 = vadd.xlane.f32.xlu0 %v1764
      %v1766 = vpop.xlane.xlu0 %1765
      %v1767 = vsel %vm1486, %v1751, 0.0
      %1768 = vadd.xlane.f32.xlu0 %v1767
      %v1769 = vpop.xlane.xlu0 %1768
      %v1770 = vsel %vm1486, %v1753, 0.0
      %1771 = vadd.xlane.f32.xlu0 %v1770
      %v1772 = vpop.xlane.xlu0 %1771
      %v1773 = vsel %vm1486, %v1755, 0.0
      %1774 = vadd.xlane.f32.xlu0 %v1773
      %v1775 = vpop.xlane.xlu0 %1774
      %v1776 = vsel %vm1486, %v1757, 0.0
      %1777 = vadd.xlane.f32.xlu0 %v1776
      %v1778 = vpop.xlane.xlu0 %1777
      %v1779 = vsel %vm1486, %v1759, 0.0
      %1780 = vadd.xlane.f32.xlu0 %v1779
      %v1781 = vpop.xlane.xlu0 %1780
      %v1782 = vsel %vm1486, %v1761, 0.0
      %1783 = vadd.xlane.f32.xlu0 %v1782
      %v1784 = vpop.xlane.xlu0 %1783
      %v1785 = vsel %vm1486, %v1763, 0.0
      %1786 = vadd.xlane.f32.xlu0 %v1785
      %v1787 = vpop.xlane.xlu0 %1786
      %v1788 = vlog2.pop %v1766
      %v1789 = vmul.f32 %v1788, 0.6931472
      %v1790 = vlog2.pop %v1769
      %v1791 = vmul.f32 %v1790, 0.6931472
      %v1792 = vlog2.pop %v1772
      %v1793 = vmul.f32 %v1792, 0.6931472
      %v1794 = vlog2.pop %v1775
      %v1795 = vmul.f32 %v1794, 0.6931472
      %v1796 = vlog2.pop %v1778
      %v1797 = vmul.f32 %v1796, 0.6931472
      %v1798 = vlog2.pop %v1781
      %v1799 = vmul.f32 %v1798, 0.6931472
      %v1800 = vlog2.pop %v1784
      %v1801 = vmul.f32 %v1800, 0.6931472
      %v1802 = vlog2.pop %v1787
      %v1803 = vmul.f32 %v1802, 0.6931472
      %v1804 = vsub.f32 %v1740, %v1789
      %v1805 = vsub.f32 %v1741, %v1791
      %v1806 = vsub.f32 %v1742, %v1793
      %v1807 = vsub.f32 %v1743, %v1795
      %v1808 = vsub.f32 %v1744, %v1797
      %v1809 = vsub.f32 %v1745, %v1799
      %v1810 = vsub.f32 %v1746, %v1801
      %v1811 = vsub.f32 %v1747, %v1803
      %v1812 = vmul.f32 %v1804, %v1507
      %v1813 = vmul.f32 %v1805, %v1507
      %v1814 = vmul.f32 %v1806, %v1507
      %v1815 = vmul.f32 %v1807, %v1507
      %v1816 = vmul.f32 %v1808, %v1507
      %v1817 = vmul.f32 %v1809, %v1507
      %v1818 = vmul.f32 %v1810, %v1507
      %v1819 = vmul.f32 %v1811, %v1507
      %v1820 = vsel %vm1486, %v1812, 0.0
      %1821 = vadd.xlane.f32.xlu0 %v1820
      %v1822 = vpop.xlane.xlu0 %1821
      %v1823 = vsel %vm1486, %v1813, 0.0
      %1824 = vadd.xlane.f32.xlu0 %v1823
      %v1825 = vpop.xlane.xlu0 %1824
      %v1826 = vsel %vm1486, %v1814, 0.0
      %1827 = vadd.xlane.f32.xlu0 %v1826
      %v1828 = vpop.xlane.xlu0 %1827
      %v1829 = vsel %vm1486, %v1815, 0.0
      %1830 = vadd.xlane.f32.xlu0 %v1829
      %v1831 = vpop.xlane.xlu0 %1830
      %v1832 = vsel %vm1486, %v1816, 0.0
      %1833 = vadd.xlane.f32.xlu0 %v1832
      %v1834 = vpop.xlane.xlu0 %1833
      %v1835 = vsel %vm1486, %v1817, 0.0
      %1836 = vadd.xlane.f32.xlu0 %v1835
      %v1837 = vpop.xlane.xlu0 %1836
      %v1838 = vsel %vm1486, %v1818, 0.0
      %1839 = vadd.xlane.f32.xlu0 %v1838
      %v1840 = vpop.xlane.xlu0 %1839
      %v1841 = vsel %vm1486, %v1819, 0.0
      %1842 = vadd.xlane.f32.xlu0 %v1841
      %v1843 = vpop.xlane.xlu0 %1842
      %v1844 = vsub.f32 0.0, %v1822
      %v1845 = vsub.f32 0.0, %v1825
      %v1846 = vsub.f32 0.0, %v1828
      %v1847 = vsub.f32 0.0, %v1831
      %v1848 = vsub.f32 0.0, %v1834
      %v1849 = vsub.f32 0.0, %v1837
      %v1850 = vsub.f32 0.0, %v1840
      %v1851 = vsub.f32 0.0, %v1843
      %v1852 = vlaneseq
      %v1853 = vshrl.u32 %v1852, 7
      %vm1854 = vcmp.lt.s32.totalorder %v1853, 4
      %vm1855 = vcmp.lt.s32.totalorder %v1504, 4
      %vm1856 = vmand %vm1854, %vm1855
      %vm1857 = vcmp.ne.s32.totalorder %v1853, %v1504
      %vm1858 = vmand %vm1856, %vm1857
      %v1859 = vsel %vm1858, 1, 0
      %v1860 = vcvt.s32.f32 %v1859
      %v1861 = vadd.f32 %v1708, %v1844
      %v1862 = vadd.f32 %v1709, %v1845
      %v1863 = vadd.f32 %v1710, %v1846
      %v1864 = vadd.f32 %v1711, %v1847
      %v1865 = vadd.f32 %v1712, %v1848
      %v1866 = vadd.f32 %v1713, %v1849
      %v1867 = vadd.f32 %v1714, %v1850
      %v1868 = vadd.f32 %v1715, %v1851
      %v1870 = vlaneseq
      %v1871 = vshrl.u32 %v1870, 7
      %v1872 = vsub.s32 0, %v1871
      %v1873 = vrot.slane %v1860, %v1872
      %1875 = vbcast.lane.b32.xlu0 %v1873, 256
      %v1876 = vpop.permute.xlu0 %1875
      %v1877 = vlaneseq
      %v1878 = vshrl.u32 %v1877, 7
      %v1879 = vsub.s32 1, %v1878
      %v1880 = vrot.slane %v1860, %v1879
      %1882 = vbcast.lane.b32.xlu0 %v1880, 256
      %v1883 = vpop.permute.xlu0 %1882
      %v1884 = vlaneseq
      %v1885 = vshrl.u32 %v1884, 7
      %v1886 = vsub.s32 2, %v1885
      %v1887 = vrot.slane %v1860, %v1886
      %1889 = vbcast.lane.b32.xlu0 %v1887, 256
      %v1890 = vpop.permute.xlu0 %1889
      %v1891 = vlaneseq
      %v1892 = vshrl.u32 %v1891, 7
      %v1893 = vsub.s32 3, %v1892
      %v1894 = vrot.slane %v1860, %v1893
      %1896 = vbcast.lane.b32.xlu0 %v1894, 256
      %v1897 = vpop.permute.xlu0 %1896
      %v1898 = vlaneseq
      %v1899 = vshrl.u32 %v1898, 7
      %v1900 = vsub.s32 4, %v1899
      %v1901 = vrot.slane %v1860, %v1900
      %1903 = vbcast.lane.b32.xlu0 %v1901, 256
      %v1904 = vpop.permute.xlu0 %1903
      %v1905 = vlaneseq
      %v1906 = vshrl.u32 %v1905, 7
      %v1907 = vsub.s32 5, %v1906
      %v1908 = vrot.slane %v1860, %v1907
      %1910 = vbcast.lane.b32.xlu0 %v1908, 256
      %v1911 = vpop.permute.xlu0 %1910
      %v1912 = vlaneseq
      %v1913 = vshrl.u32 %v1912, 7
      %v1914 = vsub.s32 6, %v1913
      %v1915 = vrot.slane %v1860, %v1914
      %1917 = vbcast.lane.b32.xlu0 %v1915, 256
      %v1918 = vpop.permute.xlu0 %1917
      %v1919 = vlaneseq
      %v1920 = vshrl.u32 %v1919, 7
      %v1921 = vsub.s32 7, %v1920
      %v1922 = vrot.slane %v1860, %v1921
      %1924 = vbcast.lane.b32.xlu0 %v1922, 256
      %v1925 = vpop.permute.xlu0 %1924
      %v1934 = vmul.f32 %v1861, %v1876
      %v1935 = vmul.f32 %v1862, %v1883
      %v1936 = vmul.f32 %v1863, %v1890
      %v1937 = vmul.f32 %v1864, %v1897
      %v1938 = vmul.f32 %v1865, %v1904
      %v1939 = vmul.f32 %v1866, %v1911
      %v1940 = vmul.f32 %v1867, %v1918
      %v1941 = vmul.f32 %v1868, %v1925
      %1950 = vset.pattern.permute.xlu0 0
      %1951 = vperm.xlu0 %1950, %v1934
      %v1952 = vpop.permute.xlu0 %1951
      %1953 = vset.pattern.permute.xlu0 0
      %1954 = vperm.xlu0 %1953, %v1935
      %v1955 = vpop.permute.xlu0 %1954
      %1956 = vset.pattern.permute.xlu0 0
      %1957 = vperm.xlu0 %1956, %v1936
      %v1958 = vpop.permute.xlu0 %1957
      %1959 = vset.pattern.permute.xlu0 0
      %1960 = vperm.xlu0 %1959, %v1937
      %v1961 = vpop.permute.xlu0 %1960
      %1962 = vset.pattern.permute.xlu0 0
      %1963 = vperm.xlu0 %1962, %v1938
      %v1964 = vpop.permute.xlu0 %1963
      %1965 = vset.pattern.permute.xlu0 0
      %1966 = vperm.xlu0 %1965, %v1939
      %v1967 = vpop.permute.xlu0 %1966
      %1968 = vset.pattern.permute.xlu0 0
      %1969 = vperm.xlu0 %1968, %v1940
      %v1970 = vpop.permute.xlu0 %1969
      %1971 = vset.pattern.permute.xlu0 0
      %1972 = vperm.xlu0 %1971, %v1941
      %v1973 = vpop.permute.xlu0 %1972
      %v1974 = vlaneseq
      %v1975 = vshrl.u32 %v1974, 7
      %v1976 = vsub.s32 %v1504, %v1975
      %v1977 = vrot.slane %v1952, %v1976
      %v1978 = vlaneseq
      %v1979 = vshrl.u32 %v1978, 7
      %v1980 = vsub.s32 %v1504, %v1979
      %v1981 = vrot.slane %v1955, %v1980
      %v1982 = vlaneseq
      %v1983 = vshrl.u32 %v1982, 7
      %v1984 = vsub.s32 %v1504, %v1983
      %v1985 = vrot.slane %v1958, %v1984
      %v1986 = vlaneseq
      %v1987 = vshrl.u32 %v1986, 7
      %v1988 = vsub.s32 %v1504, %v1987
      %v1989 = vrot.slane %v1961, %v1988
      %v1990 = vlaneseq
      %v1991 = vshrl.u32 %v1990, 7
      %v1992 = vsub.s32 %v1504, %v1991
      %v1993 = vrot.slane %v1964, %v1992
      %v1994 = vlaneseq
      %v1995 = vshrl.u32 %v1994, 7
      %v1996 = vsub.s32 %v1504, %v1995
      %v1997 = vrot.slane %v1967, %v1996
      %v1998 = vlaneseq
      %v1999 = vshrl.u32 %v1998, 7
      %v2000 = vsub.s32 %v1504, %v1999
      %v2001 = vrot.slane %v1970, %v2000
      %v2002 = vlaneseq
      %v2003 = vshrl.u32 %v2002, 7
      %v2004 = vsub.s32 %v1504, %v2003
      %v2005 = vrot.slane %v1973, %v2004
      %vm2006 = vcmask 1041409
      %v2007 = vsel %vm2006, %v1981, %v1977
      %vm2008 = vcmask 1042434
      %v2009 = vsel %vm2008, %v1985, %v2007
      %vm2010 = vcmask 1043459
      %v2011 = vsel %vm2010, %v1989, %v2009
      %vm2012 = vcmask 1044484
      %v2013 = vsel %vm2012, %v1993, %v2011
      %vm2014 = vcmask 1045509
      %v2015 = vsel %vm2014, %v1997, %v2013
      %vm2016 = vcmask 1046534
      %v2017 = vsel %vm2016, %v2001, %v2015
      %vm2018 = vcmask 1047559
      %v2019 = vsel %vm2018, %v2005, %v2017
      %vm2021 = vcmask 64512
      %v2022 = vsel %vm2021, %v2019, 0.0
      %2023 = vadd.xlane.f32.xlu0 %v2022
      %v2024 = vpop.xlane.xlu0 %2023
      %v2025 = vrot.slane %v2024, 4
      %v2026 = vadd.f32 %v2024, %v2025
      %v2027 = vrot.slane %v2026, 2
      %v2028 = vadd.f32 %v2026, %v2027
      %v2029 = vrot.slane %v2028, 1
      %v2030 = vadd.f32 %v2028, %v2029
      %v2031 = vadd.f32 %v2030, 0.0
      %v2032 = vmul.f32 %v2031, 0.083333336
      %2033 = vst [vmem:[%s243] sm:$0x1] %v2032
      %p2034 = scmp.lt.s32.totalorder %s16, 1
      %s2035 = scalar_select %p2034, %s16, 1
      %s2036 = smul.addr %s2035, 8
      %s2037 = smul.addr %s2036, 8
      %s2038 = scalar_lea.vmem %s3, %s2037
      %p2039 = scmp.lt.s32.totalorder %s16, 1
      %s2040 = scalar_select %p2039, %s16, 1
      %s2041 = scalar_lea.vmem %s4, %s2040
      // Predicated region
      $region33: #{forward.1} parent=31 // pred_check
        %p2042 = pneg %p112
      $region34: #{forward.1} parent=31 // pred_check_branch
        %2044 = sbr.rel (%p2042) target = $region36
      $region35: #{forward.1} parent=31 // pred_region
        _
      $region36: #{forward.1} parent=31 // pred_fallthru
        _
      // Predicated region
      $region37: #{forward.1} parent=31 // pred_check
        %p2045 = pneg %p138
      $region38: #{forward.1} parent=31 // pred_check_branch
        %2047 = sbr.rel (%p2045) target = $region40
      $region39: #{forward.1} parent=31 // pred_region
        _
      $region40: #{forward.1} parent=31 // pred_fallthru
        _
    $region32: #{forward.1} parent=5 // pred_fallthru
      _
    %p2048 = scmp.le.s32.totalorder 2, %s11
    // Predicated region
    $region41: #{forward.1} parent=5 // pred_check
      %p2049 = pneg %p2048
    $region42: #{forward.1} parent=5 // pred_check_branch
      %2051 = sbr.rel (%p2049) target = $region44
    $region43: #{forward.1} parent=5 // pred_region
      %s2052 = ssub.s32 %s11, 2
      // Predicated region
      $region45: #{forward.1} parent=43 // pred_check
        %p2053 = pneg %p118
      $region46: #{forward.1} parent=43 // pred_check_branch
        %2055 = sbr.rel (%p2053) target = $region48
      $region47: #{forward.1} parent=43 // pred_region
        %p2056 = scmp.lt.s32.totalorder %s17, 1
        %s2057 = scalar_select %p2056, %s17, 1
        %s2058 = smul.addr %s2057, 8
        %s2059 = smul.addr %s2058, 8
        %s2060 = scalar_lea.vmem %s3, %s2059
      $region48: #{forward.1} parent=43 // pred_fallthru
        _
      // Predicated region
      $region49: #{forward.1} parent=43 // pred_check
        %p2061 = pneg %p144
      $region50: #{forward.1} parent=43 // pred_check_branch
        %2063 = sbr.rel (%p2061) target = $region52
      $region51: #{forward.1} parent=43 // pred_region
        %p2064 = scmp.lt.s32.totalorder %s17, 1
        %s2065 = scalar_select %p2064, %s17, 1
        %s2066 = scalar_lea.vmem %s4, %s2065
      $region52: #{forward.1} parent=43 // pred_fallthru
        _
    $region44: #{forward.1} parent=5 // pred_fallthru
      _
  $region6: #{forward.1} parent=0 // loop_footer
    %s15 = sadd.s32 1, %s11
  $region7: #{forward.1} parent=0 // loop_footer_branch
    %10 = sbr.rel target = $region3
  $region8: #{forward.1} parent=0 // loop_exit
    _

</llo_original>
